<compile_context>
chip_gen: v5e
topology: v5e:2x2
jax: 0.10.0
libtpu: 0.0.40
codegen_flags: <defaults>
</compile_context>

<pallas_src>
import jax
import jax.numpy as jnp
from jax.experimental import pallas as pl
from jax.experimental.pallas import tpu as pltpu


def _round_up(x, m):
    return ((x + m - 1) // m) * m


# -----------------------------------------------------------------------------
# Pallas kernel: per-tile WideDeep hot path (mean-pool + MLP + wide + sigmoid).
# -----------------------------------------------------------------------------
def widedeep_kernel(item_ref, hist_ref, wide_ref,
                    w1i_ref, w1h_ref, b1_ref, w2_ref, b2_ref, wo_ref, bo_ref,
                    prob_ref):
    # user_behavior = mean over history dim   (TB, L, Dh) -> (TB, Dh), f32.
    user = jnp.mean(hist_ref[...].astype(jnp.float32), axis=1)

    # deep MLP.  w1 was split in the wrapper, so instead of a lane-crossing
    # concat we compute h1 = item @ w1_item + user @ w1_hist + b1.
    # bf16 MXU operands, f32 accumulation.  (dropout is a no-op in eval)
    h1 = (jnp.dot(item_ref[...], w1i_ref[...], preferred_element_type=jnp.float32)
          + jnp.dot(user.astype(jnp.bfloat16), w1h_ref[...],
                    preferred_element_type=jnp.float32))
    h1 = jnp.maximum(h1 + b1_ref[...], 0.0)

    h2 = jnp.dot(h1.astype(jnp.bfloat16), w2_ref[...],
                 preferred_element_type=jnp.float32)
    h2 = jnp.maximum(h2 + b2_ref[...], 0.0)

    # dnn_fc_out: (TB, H2) @ (H2, 1) done as VPU multiply + lane reduce
    # (an N=1 MXU matmul would waste a whole vmatmul push/pop per tile).
    deep = jnp.sum(h2 * wo_ref[...], axis=-1)            # (TB,)

    # wide part: sum of first-order embeddings  (TB, 1 + attr_fnum) -> (TB,)
    wide = jnp.sum(wide_ref[...], axis=-1)                # (TB,)

    # lane-dense logit row: (1, TB)
    logit = (deep + wide)[None, :] + bo_ref[...]

    # get_ctr_output (output_dim == 1): clamp(sigmoid(logit), 1e-7, 1-1e-7)
    prob = jnp.clip(jax.nn.sigmoid(logit), 1e-7, 1.0 - 1e-7)
    prob_ref[...] = prob.astype(prob_ref.dtype)


def widedeep_pallas(item_emb, hist_emb, wide_first, params, *, tile_b=256):
    """Batch-tiled Pallas call.  Returns clamped sigmoid probabilities (B, 1)."""
    B, itm_dim = item_emb.shape
    _, L, hist_dim = hist_emb.shape
    wf = wide_first.shape[1]
    H1 = params["w1"].shape[1]
    H2 = params["w2"].shape[1]

    # Tile the batch.  TB is a multiple of 128 so the (1, TB) output block is
    # lane-aligned; default 256 keeps the (TB, L, Dh) hist double-buffers well
    # under v7x's 64 MiB VMEM even for long histories.
    TB = _round_up(min(tile_b, _round_up(B, 128)), 128)
    B_pad = _round_up(B, TB)
    G = B_pad // TB
    pad = B_pad - B

    # bf16 for the bulky DMA'd operands / MXU weights; f32 for everything tiny.
    item_b = jnp.pad(item_emb, ((0, pad), (0, 0))).astype(jnp.bfloat16)
    hist_b = jnp.pad(hist_emb, ((0, pad), (0, 0), (0, 0))).astype(jnp.bfloat16)
    wide_f = jnp.pad(wide_first, ((0, pad), (0, 0))).astype(jnp.float32)

    # Split w1 so the kernel never concatenates item_emb and user_behavior.
    w1i = params["w1"][:itm_dim].astype(jnp.bfloat16)
    w1h = params["w1"][itm_dim:].astype(jnp.bfloat16)
    w2 = params["w2"].astype(jnp.bfloat16)
    b1 = params["b1"].astype(jnp.float32)
    b2 = params["b2"].astype(jnp.float32)
    wo_row = params["wo"].reshape(1, H2).astype(jnp.float32)
    bo = params["bo"].reshape(1, 1).astype(jnp.float32)

    cost = pl.CostEstimate(
        flops=int(2 * B_pad * (itm_dim * H1 + hist_dim * H1 + H1 * H2 + H2)),
        transcendentals=int(B_pad),
        bytes_accessed=int(item_b.size * 2 + hist_b.size * 2 + wide_f.size * 4
                           + (w1i.size + w1h.size + w2.size) * 2
                           + (b1.size + b2.size + wo_row.size + bo.size) * 4
                           + B_pad * 4),
    )

    in_specs = [
        pl.BlockSpec((TB, itm_dim), lambda i: (i, 0)),          # item_emb tile
        pl.BlockSpec((TB, L, hist_dim), lambda i: (i, 0, 0)),   # hist_emb tile
        pl.BlockSpec((TB, wf), lambda i: (i, 0)),               # wide features
        pl.BlockSpec((itm_dim, H1), lambda i: (0, 0)),          # w1_item (resident)
        pl.BlockSpec((hist_dim, H1), lambda i: (0, 0)),         # w1_hist (resident)
        pl.BlockSpec((1, H1), lambda i: (0, 0)),                # b1
        pl.BlockSpec((H1, H2), lambda i: (0, 0)),               # w2
        pl.BlockSpec((1, H2), lambda i: (0, 0)),                # b2
        pl.BlockSpec((1, H2), lambda i: (0, 0)),                # wo (row)
        pl.BlockSpec((1, 1), lambda i: (0, 0)),                 # bo
    ]
    out_spec = pl.BlockSpec((1, TB), lambda i: (0, i))          # lane-dense probs

    probs_row = pl.pallas_call(
        widedeep_kernel,
        out_shape=jax.ShapeDtypeStruct((1, B_pad), jnp.float32),
        grid=(G,),
        in_specs=in_specs,
        out_specs=out_spec,
        compiler_params=pltpu.CompilerParams(
            dimension_semantics=("parallel",),
            vmem_limit_bytes=32 * 1024 * 1024),
        cost_estimate=cost,
    )(item_b, hist_b, wide_f, w1i, w1h, b1, w2, b2, wo_row, bo)

    return probs_row[0, :B].reshape(B, 1)


# -----------------------------------------------------------------------------
# Plain-JAX glue: embedding lookups, parameter init, loss.
# -----------------------------------------------------------------------------
def init_params(key, item_num, attr_num, rating_num, embed_dim,
                attr_fnum, max_hist_len, dnn_deep_arch):
    item_fnum = 1 + attr_fnum
    hist_fnum = 2 + attr_fnum
    itm_emb_dim = item_fnum * embed_dim
    hist_emb_dim = hist_fnum * embed_dim
    module_inp_dim = itm_emb_dim + hist_emb_dim

    ks = jax.random.split(key, 16)
    s = 0.05
    params = {
        # embedding tables (nn.Embedding)
        "item_embedding":   jax.random.normal(ks[0], (item_num + 1, embed_dim), jnp.float32) * s,
        "attr_embedding":   jax.random.normal(ks[1], (attr_num + 1, embed_dim), jnp.float32) * s,
        "rating_embedding": jax.random.normal(ks[2], (rating_num + 1, embed_dim), jnp.float32) * s,
        # first-order (wide) embeddings, dim 1
        "fm_first_iid":     jax.random.normal(ks[3], (item_num + 1, 1), jnp.float32) * s,
        "fm_first_aid":     jax.random.normal(ks[4], (attr_num + 1, 1), jnp.float32) * s,
        # deep MLP (dnn_deep_arch), then final fc to 1
        "w1": jax.random.normal(ks[5], (module_inp_dim, dnn_deep_arch[0]), jnp.float32) * s,
        "b1": jax.random.normal(ks[6], (1, dnn_deep_arch[0]), jnp.float32) * s,
        "w2": jax.random.normal(ks[7], (dnn_deep_arch[0], dnn_deep_arch[1]), jnp.float32) * s,
        "b2": jax.random.normal(ks[8], (1, dnn_deep_arch[1]), jnp.float32) * s,
        "wo": jax.random.normal(ks[9], (dnn_deep_arch[1], 1), jnp.float32) * s,
        "bo": jax.random.normal(ks[10], (1, 1), jnp.float32) * s,
    }
    dims = dict(embed_dim=embed_dim, attr_fnum=attr_fnum,
                max_hist_len=max_hist_len, itm_emb_dim=itm_emb_dim,
                hist_emb_dim=hist_emb_dim, module_inp_dim=module_inp_dim)
    return params, dims


def widedeep_forward(params, dims, inp):
    """Mirrors WideDeep.forward + get_ctr_output (eval mode, dropout off)."""
    ed, af, L = dims["embed_dim"], dims["attr_fnum"], dims["max_hist_len"]
    B = inp["iid"].shape[0]

    # ---- process_input (embedding gathers; plain-JAX glue) ----
    # TODO(synk): pull these gathers into the kernel via PrefetchScalarGridSpec
    # row-gather so hist_emb never round-trips through HBM twice.
    hist_item_emb = jnp.take(params["item_embedding"], inp["hist_iid_seq"], axis=0)       # (B, L, ed)
    hist_attr_emb = jnp.take(params["attr_embedding"], inp["hist_aid_seq"], axis=0)       # (B, L, af, ed)
    hist_attr_emb = hist_attr_emb.reshape(B, L, ed * af)
    hist_rate_emb = jnp.take(params["rating_embedding"], inp["hist_rate_seq"], axis=0)    # (B, L, ed)
    hist_emb = jnp.concatenate([hist_item_emb, hist_attr_emb, hist_rate_emb], axis=-1)    # (B, L, hist_emb_dim)

    iid_emb = jnp.take(params["item_embedding"], inp["iid"], axis=0)                      # (B, ed)
    attr_emb = jnp.take(params["attr_embedding"], inp["aid"], axis=0).reshape(B, ed * af) # (B, ed*af)
    item_emb = jnp.concatenate([iid_emb, attr_emb], axis=-1)                              # (B, itm_emb_dim)

    # wide first-order features
    iid_first = jnp.take(params["fm_first_iid"], inp["iid"], axis=0).reshape(B, 1)        # (B, 1)
    aid_first = jnp.take(params["fm_first_aid"], inp["aid"], axis=0).reshape(B, af)       # (B, af)
    wide_first = jnp.concatenate([iid_first, aid_first], axis=1)                          # (B, 1 + af)

    # ---- Pallas kernel: mean-pool + MLP + wide sum + clamped sigmoid ----
    probs = widedeep_pallas(item_emb, hist_emb, wide_first, params)                       # (B, 1)

    # ---- BCE loss (BaseModel.get_ctr_output, output_dim == 1) ----
    labels = inp["lb"].astype(jnp.float32).reshape(-1)
    p = probs.reshape(-1)
    loss = -jnp.mean(labels * jnp.log(p) + (1.0 - labels) * jnp.log(1.0 - p))
    return {"logits": probs, "labels": labels, "loss": loss}


# Pure-JAX reference mirroring the kernel's bf16/f32 mixed precision.
def widedeep_reference_probs(params, item_emb, hist_emb, wide_first):
    itm_dim = item_emb.shape[1]
    w1i = params["w1"][:itm_dim].astype(jnp.bfloat16)
    w1h = params["w1"][itm_dim:].astype(jnp.bfloat16)
    user = jnp.mean(hist_emb.astype(jnp.bfloat16).astype(jnp.float32), axis=1)
    h1 = (jnp.dot(item_emb.astype(jnp.bfloat16), w1i, preferred_element_type=jnp.float32)
          + jnp.dot(user.astype(jnp.bfloat16), w1h, preferred_element_type=jnp.float32))
    h1 = jnp.maximum(h1 + params["b1"], 0.0)
    h2 = jnp.dot(h1.astype(jnp.bfloat16), params["w2"].astype(jnp.bfloat16),
                 preferred_element_type=jnp.float32)
    h2 = jnp.maximum(h2 + params["b2"], 0.0)
    deep = h2 @ params["wo"] + params["bo"]
    wide = jnp.sum(wide_first, axis=1, keepdims=True)
    return jnp.clip(jax.nn.sigmoid(wide + deep), 1e-7, 1.0 - 1e-7)


if __name__ == "__main__":
    # Small, WideDeep-consistent shapes.
    B, embed_dim, attr_fnum, max_hist_len = 8, 32, 2, 8
    item_num, attr_num, rating_num = 50, 20, 5
    dnn_deep_arch = [64, 32]

    key = jax.random.PRNGKey(0)
    kp, k1, k2, k3, k4, k5, k6 = jax.random.split(key, 7)
    params, dims = init_params(kp, item_num, attr_num, rating_num,
                               embed_dim, attr_fnum, max_hist_len, dnn_deep_arch)

    inp = {
        "iid":           jax.random.randint(k1, (B,), 0, item_num + 1),
        "aid":           jax.random.randint(k2, (B, attr_fnum), 0, attr_num + 1),
        "hist_iid_seq":  jax.random.randint(k3, (B, max_hist_len), 0, item_num + 1),
        "hist_aid_seq":  jax.random.randint(k4, (B, max_hist_len, attr_fnum), 0, attr_num + 1),
        "hist_rate_seq": jax.random.randint(k5, (B, max_hist_len), 0, rating_num + 1),
        "lb":            jax.random.randint(k6, (B,), 0, 2),
    }

    outputs = jax.block_until_ready(widedeep_forward(params, dims, inp))

    # Cross-check kernel output against a pure-JAX reference (same precision recipe).
    ed, af, L = embed_dim, attr_fnum, max_hist_len
    hist_item = jnp.take(params["item_embedding"], inp["hist_iid_seq"], axis=0)
    hist_attr = jnp.take(params["attr_embedding"], inp["hist_aid_seq"], axis=0).reshape(B, L, ed * af)
    hist_rate = jnp.take(params["rating_embedding"], inp["hist_rate_seq"], axis=0)
    hist_emb = jnp.concatenate([hist_item, hist_attr, hist_rate], axis=-1)
    iid_emb = jnp.take(params["item_embedding"], inp["iid"], axis=0)
    attr_emb = jnp.take(params["attr_embedding"], inp["aid"], axis=0).reshape(B, ed * af)
    item_emb = jnp.concatenate([iid_emb, attr_emb], axis=-1)
    wide_first = jnp.concatenate(
        [jnp.take(params["fm_first_iid"], inp["iid"], axis=0).reshape(B, 1),
         jnp.take(params["fm_first_aid"], inp["aid"], axis=0).reshape(B, af)], axis=1)
    ref_probs = widedeep_reference_probs(params, item_emb, hist_emb, wide_first)

    assert outputs["logits"].shape == (B, 1)
    assert jnp.allclose(outputs["logits"], ref_probs, atol=2e-3, rtol=2e-3), "mismatch vs reference"
    assert bool(jnp.isfinite(outputs["loss"]))

    print("KERNEL_OK")
</pallas_src>

<mosaic_0001>
module attributes {stable_mosaic.version = 11 : i64} {
  func.func @widedeep_kernel(%arg0: i32, %arg1: memref<128x96xbf16, #tpu.memory_space<vmem>>, %arg2: memref<128x8x128xbf16, #tpu.memory_space<vmem>>, %arg3: memref<128x3xf32, #tpu.memory_space<vmem>>, %arg4: memref<96x64xbf16, #tpu.memory_space<vmem>>, %arg5: memref<128x64xbf16, #tpu.memory_space<vmem>>, %arg6: memref<1x64xf32, #tpu.memory_space<vmem>>, %arg7: memref<64x32xbf16, #tpu.memory_space<vmem>>, %arg8: memref<1x32xf32, #tpu.memory_space<vmem>>, %arg9: memref<1x32xf32, #tpu.memory_space<vmem>>, %arg10: memref<1x1xf32, #tpu.memory_space<vmem>>, %arg11: memref<1x128xf32, #tpu.memory_space<vmem>>) attributes {dimension_semantics = [#tpu.dimension_semantics<parallel>], iteration_bounds = array<i64: 1>, scalar_prefetch = 0 : i64, scratch_operands = 0 : i64, tpu.core_type = #tpu.core_type<tc>, window_params = [{transform_indices = @transform_0, window_bounds = array<i64: 128, 96>}, {transform_indices = @transform_1, window_bounds = array<i64: 128, 8, 128>}, {transform_indices = @transform_2, window_bounds = array<i64: 128, 3>}, {pipeline_mode = #tpu.pipeline_mode<synchronous>, transform_indices = @transform_3, window_bounds = array<i64: 96, 64>}, {pipeline_mode = #tpu.pipeline_mode<synchronous>, transform_indices = @transform_4, window_bounds = array<i64: 128, 64>}, {pipeline_mode = #tpu.pipeline_mode<synchronous>, transform_indices = @transform_5, window_bounds = array<i64: 1, 64>}, {pipeline_mode = #tpu.pipeline_mode<synchronous>, transform_indices = @transform_6, window_bounds = array<i64: 64, 32>}, {pipeline_mode = #tpu.pipeline_mode<synchronous>, transform_indices = @transform_7, window_bounds = array<i64: 1, 32>}, {pipeline_mode = #tpu.pipeline_mode<synchronous>, transform_indices = @transform_8, window_bounds = array<i64: 1, 32>}, {pipeline_mode = #tpu.pipeline_mode<synchronous>, transform_indices = @transform_9, window_bounds = array<i64: 1, 1>}, {transform_indices = @transform_10, window_bounds = array<i64: 1, 128>}]} {
    %c0 = arith.constant 0 : index
    %c0_0 = arith.constant 0 : index
    %c0_1 = arith.constant 0 : index
    %0 = vector.load %arg2[%c0, %c0_0, %c0_1] : memref<128x8x128xbf16, #tpu.memory_space<vmem>>, vector<128x8x128xbf16>
    %1 = arith.extf %0 : vector<128x8x128xbf16> to vector<128x8x128xf32>
    %cst = arith.constant dense<0.000000e+00> : vector<128x128xf32>
    %2 = vector.multi_reduction <add>, %1, %cst [1] : vector<128x8x128xf32> to vector<128x128xf32>
    %cst_2 = arith.constant 8.000000e+00 : f32
    %3 = vector.broadcast %cst_2 : f32 to vector<128x128xf32>
    %4 = arith.divf %2, %3 : vector<128x128xf32>
    %c0_3 = arith.constant 0 : index
    %c0_4 = arith.constant 0 : index
    %5 = vector.load %arg1[%c0_3, %c0_4] : memref<128x96xbf16, #tpu.memory_space<vmem>>, vector<128x96xbf16>
    %c0_5 = arith.constant 0 : index
    %c0_6 = arith.constant 0 : index
    %6 = vector.load %arg4[%c0_5, %c0_6] : memref<96x64xbf16, #tpu.memory_space<vmem>>, vector<96x64xbf16>
    %cst_7 = arith.constant dense<0.000000e+00> : vector<128x64xf32>
    %7 = tpu.matmul %5, %6, %cst_7 {dimension_numbers = #tpu.dot_dimension_numbers<[1], [0], [0], [1], [0, 0, 1, 1], [], []>} : vector<128x96xbf16>, vector<96x64xbf16>, vector<128x64xf32> -> vector<128x64xf32>
    %8 = arith.truncf %4 : vector<128x128xf32> to vector<128x128xbf16>
    %c0_8 = arith.constant 0 : index
    %c0_9 = arith.constant 0 : index
    %9 = vector.load %arg5[%c0_8, %c0_9] : memref<128x64xbf16, #tpu.memory_space<vmem>>, vector<128x64xbf16>
    %cst_10 = arith.constant dense<0.000000e+00> : vector<128x64xf32>
    %10 = tpu.matmul %8, %9, %cst_10 {dimension_numbers = #tpu.dot_dimension_numbers<[1], [0], [0], [1], [0, 0, 1, 1], [], []>} : vector<128x128xbf16>, vector<128x64xbf16>, vector<128x64xf32> -> vector<128x64xf32>
    %11 = arith.addf %7, %10 : vector<128x64xf32>
    %c0_11 = arith.constant 0 : index
    %c0_12 = arith.constant 0 : index
    %12 = vector.load %arg6[%c0_11, %c0_12] : memref<1x64xf32, #tpu.memory_space<vmem>>, vector<1x64xf32>
    %13 = vector.broadcast %12 : vector<1x64xf32> to vector<128x64xf32>
    %14 = arith.addf %11, %13 : vector<128x64xf32>
    %cst_13 = arith.constant 0.000000e+00 : f32
    %15 = vector.broadcast %cst_13 : f32 to vector<128x64xf32>
    %16 = arith.maximumf %14, %15 : vector<128x64xf32>
    %17 = arith.truncf %16 : vector<128x64xf32> to vector<128x64xbf16>
    %c0_14 = arith.constant 0 : index
    %c0_15 = arith.constant 0 : index
    %18 = vector.load %arg7[%c0_14, %c0_15] : memref<64x32xbf16, #tpu.memory_space<vmem>>, vector<64x32xbf16>
    %cst_16 = arith.constant dense<0.000000e+00> : vector<128x32xf32>
    %19 = tpu.matmul %17, %18, %cst_16 {dimension_numbers = #tpu.dot_dimension_numbers<[1], [0], [0], [1], [0, 0, 1, 1], [], []>} : vector<128x64xbf16>, vector<64x32xbf16>, vector<128x32xf32> -> vector<128x32xf32>
    %c0_17 = arith.constant 0 : index
    %c0_18 = arith.constant 0 : index
    %20 = vector.load %arg8[%c0_17, %c0_18] : memref<1x32xf32, #tpu.memory_space<vmem>>, vector<1x32xf32>
    %21 = vector.broadcast %20 : vector<1x32xf32> to vector<128x32xf32>
    %22 = arith.addf %19, %21 : vector<128x32xf32>
    %cst_19 = arith.constant 0.000000e+00 : f32
    %23 = vector.broadcast %cst_19 : f32 to vector<128x32xf32>
    %24 = arith.maximumf %22, %23 : vector<128x32xf32>
    %c0_20 = arith.constant 0 : index
    %c0_21 = arith.constant 0 : index
    %25 = vector.load %arg9[%c0_20, %c0_21] : memref<1x32xf32, #tpu.memory_space<vmem>>, vector<1x32xf32>
    %26 = vector.broadcast %25 : vector<1x32xf32> to vector<128x32xf32>
    %27 = arith.mulf %24, %26 : vector<128x32xf32>
    %cst_22 = arith.constant dense<0.000000e+00> : vector<128xf32>
    %28 = vector.multi_reduction <add>, %27, %cst_22 [1] : vector<128x32xf32> to vector<128xf32>
    %c0_23 = arith.constant 0 : index
    %c0_24 = arith.constant 0 : index
    %29 = vector.load %arg3[%c0_23, %c0_24] : memref<128x3xf32, #tpu.memory_space<vmem>>, vector<128x3xf32>
    %cst_25 = arith.constant dense<0.000000e+00> : vector<128xf32>
    %30 = vector.multi_reduction <add>, %29, %cst_25 [1] : vector<128x3xf32> to vector<128xf32>
    %31 = arith.addf %28, %30 : vector<128xf32>
    %32 = vector.shape_cast %31 : vector<128xf32> to vector<1x128xf32>
    %c0_26 = arith.constant 0 : index
    %c0_27 = arith.constant 0 : index
    %33 = vector.load %arg10[%c0_26, %c0_27] : memref<1x1xf32, #tpu.memory_space<vmem>>, vector<1x1xf32>
    %34 = vector.broadcast %33 : vector<1x1xf32> to vector<1x128xf32>
    %35 = arith.addf %32, %34 : vector<1x128xf32>
    %36 = arith.negf %35 : vector<1x128xf32>
    %37 = math.exp %36 : vector<1x128xf32>
    %cst_28 = arith.constant 1.000000e+00 : f32
    %38 = vector.broadcast %cst_28 : f32 to vector<1x128xf32>
    %39 = arith.addf %38, %37 : vector<1x128xf32>
    %40 = arith.divf %38, %39 : vector<1x128xf32>
    %cst_29 = arith.constant 1.000000e-07 : f32
    %cst_30 = arith.constant 0.99999988 : f32
    %41 = vector.broadcast %cst_29 : f32 to vector<1x128xf32>
    %42 = arith.maximumf %41, %40 : vector<1x128xf32>
    %43 = vector.broadcast %cst_30 : f32 to vector<1x128xf32>
    %44 = arith.minimumf %43, %42 : vector<1x128xf32>
    %c0_31 = arith.constant 0 : index
    %c0_32 = arith.constant 0 : index
    %45 = vector.load %arg11[%c0_31, %c0_32] : memref<1x128xf32, #tpu.memory_space<vmem>>, vector<1x128xf32>
    tpu.vector_store %arg11[%c0_31, %c0_32], %44 {strides = array<i32>} : memref<1x128xf32, #tpu.memory_space<vmem>>, vector<1x128xf32>,
    return
  }
  func.func @transform_0(%arg0: i32) -> (i32, i32) {
    %c0_i32 = arith.constant 0 : i32
    %c0_i32_0 = arith.constant 0 : i32
    return %arg0, %c0_i32 : i32, i32
  }
  func.func @transform_1(%arg0: i32) -> (i32, i32, i32) {
    %c0_i32 = arith.constant 0 : i32
    %c0_i32_0 = arith.constant 0 : i32
    %c0_i32_1 = arith.constant 0 : i32
    return %arg0, %c0_i32, %c0_i32_0 : i32, i32, i32
  }
  func.func @transform_2(%arg0: i32) -> (i32, i32) {
    %c0_i32 = arith.constant 0 : i32
    %c0_i32_0 = arith.constant 0 : i32
    return %arg0, %c0_i32 : i32, i32
  }
  func.func @transform_3(%arg0: i32) -> (i32, i32) {
    %c0_i32 = arith.constant 0 : i32
    %c0_i32_0 = arith.constant 0 : i32
    %c0_i32_1 = arith.constant 0 : i32
    return %c0_i32, %c0_i32_0 : i32, i32
  }
  func.func @transform_4(%arg0: i32) -> (i32, i32) {
    %c0_i32 = arith.constant 0 : i32
    %c0_i32_0 = arith.constant 0 : i32
    %c0_i32_1 = arith.constant 0 : i32
    return %c0_i32, %c0_i32_0 : i32, i32
  }
  func.func @transform_5(%arg0: i32) -> (i32, i32) {
    %c0_i32 = arith.constant 0 : i32
    %c0_i32_0 = arith.constant 0 : i32
    %c0_i32_1 = arith.constant 0 : i32
    return %c0_i32, %c0_i32_0 : i32, i32
  }
  func.func @transform_6(%arg0: i32) -> (i32, i32) {
    %c0_i32 = arith.constant 0 : i32
    %c0_i32_0 = arith.constant 0 : i32
    %c0_i32_1 = arith.constant 0 : i32
    return %c0_i32, %c0_i32_0 : i32, i32
  }
  func.func @transform_7(%arg0: i32) -> (i32, i32) {
    %c0_i32 = arith.constant 0 : i32
    %c0_i32_0 = arith.constant 0 : i32
    %c0_i32_1 = arith.constant 0 : i32
    return %c0_i32, %c0_i32_0 : i32, i32
  }
  func.func @transform_8(%arg0: i32) -> (i32, i32) {
    %c0_i32 = arith.constant 0 : i32
    %c0_i32_0 = arith.constant 0 : i32
    %c0_i32_1 = arith.constant 0 : i32
    return %c0_i32, %c0_i32_0 : i32, i32
  }
  func.func @transform_9(%arg0: i32) -> (i32, i32) {
    %c0_i32 = arith.constant 0 : i32
    %c0_i32_0 = arith.constant 0 : i32
    %c0_i32_1 = arith.constant 0 : i32
    return %c0_i32, %c0_i32_0 : i32, i32
  }
  func.func @transform_10(%arg0: i32) -> (i32, i32) {
    %c0_i32 = arith.constant 0 : i32
    %c0_i32_0 = arith.constant 0 : i32
    return %c0_i32, %arg0 : i32, i32
  }
}

</mosaic_0001>

<llo_original>
// kernel: tpu_custom_call.1
$region0: #{tpu_custom_call.1}
  #allocation0 [shape = 'u32[]', space=smem, size = 0x4, offset = 0x4, fixed_abs, tag = 'smem constant byte address 0x4 - core index']
  #allocation1 [shape = 'u32[72,128]{1,0:T(1,128)}', space=vmem, size = 0x9000, scoped, tag = 'internal scratch']
  #allocation2 [shape = 'f32[1,1]{1,0:T(1,128)S(1)}', space=vmem, size = 0x200, scoped, tag = 'scoped memory for tpu_custom_call.1']
  %s0 = inlined_call_operand.vmem [shape: bf16[128,96], index: 0, kind: input, shape index: {}]
  %s1 = inlined_call_operand.hbm [shape: bf16[128,8,128], index: 1, kind: input, shape index: {}]
  %s2 = inlined_call_operand.vmem [shape: f32[128,3], index: 2, kind: input, shape index: {}]
  %s3 = inlined_call_operand.vmem [shape: bf16[96,64], index: 3, kind: input, shape index: {}]
  %s4 = inlined_call_operand.vmem [shape: bf16[128,64], index: 4, kind: input, shape index: {}]
  %s5 = inlined_call_operand.vmem [shape: f32[1,64], index: 5, kind: input, shape index: {}]
  %s6 = inlined_call_operand.vmem [shape: bf16[64,32], index: 6, kind: input, shape index: {}]
  %s7 = inlined_call_operand.vmem [shape: f32[1,32], index: 7, kind: input, shape index: {}]
  %s8 = inlined_call_operand.vmem [shape: f32[1,32], index: 8, kind: input, shape index: {}]
  %s9 = inlined_call_operand.<no memory space> [shape: f32[1,1], index: 9, kind: input, shape index: {}]
  %s10 = inlined_call_operand.hbm [shape: f32[1,128], index: 10, kind: output, shape index: {}]
  %s11 = sld [smem:[#allocation0]]
  $region54: #{tpu_custom_call.1} parent=0
    _
  %s13 = ssub.s32 1, %s11
  %s14 = scalar_select 0, %s13, %s11
  %v15 = vstv %s9
  %16 = vst [vmem:[#allocation2] sm:$0x1] %v15
  $region1: #{tpu_custom_call.1} parent=0
    #allocation3 [shape = 'u8[262144]{0}', space=vmem, size = 0x40000, scoped, tag = 'input window, operand 1, single buffered']
    #allocation4 [shape = 's32[1]{0}', space=sflag, size = 0x4, scoped, tag = 'scoped memory for tpu_custom_call.1']
    #allocation5 [shape = 's32[1]{0}', space=sflag, size = 0x4, scoped, tag = 'scoped memory for tpu_custom_call.1']
    #allocation6 [shape = 'u8[512]{0}', space=vmem, size = 0x400, scoped, tag = 'output window, operand 0, single buffered']
    %17 = vsyncpa [#allocation4], 0
    %18 = vsyncpa [#allocation5], 0
    // Predicated region
    $region2: #{tpu_custom_call.1} parent=1 // pred_check
      _
    $region3: #{tpu_custom_call.1} parent=1 // pred_check_branch
      %20 = sbr.rel (0) target = $region5
    $region4: #{tpu_custom_call.1} parent=1 // pred_region
      _
    $region5: #{tpu_custom_call.1} parent=1 // pred_fallthru
      _
    // Predicated region
    $region6: #{tpu_custom_call.1} parent=1 // pred_check
      _
    $region7: #{tpu_custom_call.1} parent=1 // pred_check_branch
      %22 = sbr.rel (0) target = $region9
    $region8: #{tpu_custom_call.1} parent=1 // pred_region
      %24 = vsyncadd [#allocation4], 0
      %s25 = sshll.u32 %s1, 4
      %s26 = int_to_ptr.hbm [resolvable:$true] %s25
      %s27 = sshll.u32 [#allocation3], 4
      %s28 = int_to_ptr.vmem [resolvable:$true] %s27
      %33 = dma.hbm_to_vmem [thread:$0]  %s26, 8192, %s28, [#allocation4], 64, 64, 4
    $region9: #{tpu_custom_call.1} parent=1 // pred_fallthru
      _
    // Predicated region
    $region10: #{tpu_custom_call.1} parent=1 // pred_check
      _
    $region11: #{tpu_custom_call.1} parent=1 // pred_check_branch
      %35 = sbr.rel (0) target = $region13
    $region12: #{tpu_custom_call.1} parent=1 // pred_region
      _
    $region13: #{tpu_custom_call.1} parent=1 // pred_fallthru
      _
    // Predicated region
    $region14: #{tpu_custom_call.1} parent=1 // pred_check
      _
    $region15: #{tpu_custom_call.1} parent=1 // pred_check_branch
      %37 = sbr.rel (0) target = $region17
    $region16: #{tpu_custom_call.1} parent=1 // pred_region
      _
    $region17: #{tpu_custom_call.1} parent=1 // pred_fallthru
      _
    // Predicated region
    $region18: #{tpu_custom_call.1} parent=1 // pred_check
      _
    $region19: #{tpu_custom_call.1} parent=1 // pred_check_branch
      %39 = sbr.rel (0) target = $region21
    $region20: #{tpu_custom_call.1} parent=1 // pred_region
      _
    $region21: #{tpu_custom_call.1} parent=1 // pred_fallthru
      _
    // Predicated region
    $region22: #{tpu_custom_call.1} parent=1 // pred_check
      _
    $region23: #{tpu_custom_call.1} parent=1 // pred_check_branch
      %41 = sbr.rel (0) target = $region25
    $region24: #{tpu_custom_call.1} parent=1 // pred_region
      _
    $region25: #{tpu_custom_call.1} parent=1 // pred_fallthru
      _
    // Predicated region
    $region26: #{tpu_custom_call.1} parent=1 // pred_check
      _
    $region27: #{tpu_custom_call.1} parent=1 // pred_check_branch
      %43 = sbr.rel (0) target = $region29
    $region28: #{tpu_custom_call.1} parent=1 // pred_region
      _
    $region29: #{tpu_custom_call.1} parent=1 // pred_fallthru
      _
    // Predicated region
    $region30: #{tpu_custom_call.1} parent=1 // pred_check
      _
    $region31: #{tpu_custom_call.1} parent=1 // pred_check_branch
      %45 = sbr.rel (0) target = $region33
    $region32: #{tpu_custom_call.1} parent=1 // pred_region
      _
    $region33: #{tpu_custom_call.1} parent=1 // pred_fallthru
      _
    // Predicated region
    $region34: #{tpu_custom_call.1} parent=1 // pred_check
      _
    $region35: #{tpu_custom_call.1} parent=1 // pred_check_branch
      %47 = sbr.rel (0) target = $region37
    $region36: #{tpu_custom_call.1} parent=1 // pred_region
      _
    $region37: #{tpu_custom_call.1} parent=1 // pred_fallthru
      _
    // Predicated region
    $region38: #{tpu_custom_call.1} parent=1 // pred_check
      _
    $region39: #{tpu_custom_call.1} parent=1 // pred_check_branch
      %49 = sbr.rel (0) target = $region41
    $region40: #{tpu_custom_call.1} parent=1 // pred_region
      _
    $region41: #{tpu_custom_call.1} parent=1 // pred_fallthru
      _
    // Predicated region
    $region42: #{tpu_custom_call.1} parent=1 // pred_check
      _
    $region43: #{tpu_custom_call.1} parent=1 // pred_check_branch
      %51 = sbr.rel (0) target = $region45
    $region44: #{tpu_custom_call.1} parent=1 // pred_region
      %53 = dma.done [#allocation4], 8192
    $region45: #{tpu_custom_call.1} parent=1 // pred_fallthru
      _
    %v55 = vld [vmem:[#allocation3] sm:$0xf]
    %v56 = vld [vmem:[#allocation3 + $0x4] sm:$0xf]
    %v57 = vld [vmem:[#allocation3 + $0x8] sm:$0xf]
    %v58 = vld [vmem:[#allocation3 + $0xc] sm:$0xf]
    %v59 = vld [vmem:[#allocation3 + $0x10] sm:$0xf]
    %v60 = vld [vmem:[#allocation3 + $0x14] sm:$0xf]
    %v61 = vld [vmem:[#allocation3 + $0x18] sm:$0xf]
    %v62 = vld [vmem:[#allocation3 + $0x1c] sm:$0xf]
    %v63 = vld [vmem:[#allocation3 + $0x20] sm:$0xf]
    %v64 = vld [vmem:[#allocation3 + $0x24] sm:$0xf]
    %v65 = vld [vmem:[#allocation3 + $0x28] sm:$0xf]
    %v66 = vld [vmem:[#allocation3 + $0x2c] sm:$0xf]
    %v67 = vld [vmem:[#allocation3 + $0x30] sm:$0xf]
    %v68 = vld [vmem:[#allocation3 + $0x34] sm:$0xf]
    %v69 = vld [vmem:[#allocation3 + $0x38] sm:$0xf]
    %v70 = vld [vmem:[#allocation3 + $0x3c] sm:$0xf]
    %v71 = vld [vmem:[#allocation3 + $0x40] sm:$0xf]
    %v72 = vld [vmem:[#allocation3 + $0x44] sm:$0xf]
    %v73 = vld [vmem:[#allocation3 + $0x48] sm:$0xf]
    %v74 = vld [vmem:[#allocation3 + $0x4c] sm:$0xf]
    %v75 = vld [vmem:[#allocation3 + $0x50] sm:$0xf]
    %v76 = vld [vmem:[#allocation3 + $0x54] sm:$0xf]
    %v77 = vld [vmem:[#allocation3 + $0x58] sm:$0xf]
    %v78 = vld [vmem:[#allocation3 + $0x5c] sm:$0xf]
    %v79 = vld [vmem:[#allocation3 + $0x60] sm:$0xf]
    %v80 = vld [vmem:[#allocation3 + $0x64] sm:$0xf]
    %v81 = vld [vmem:[#allocation3 + $0x68] sm:$0xf]
    %v82 = vld [vmem:[#allocation3 + $0x6c] sm:$0xf]
    %v83 = vld [vmem:[#allocation3 + $0x70] sm:$0xf]
    %v84 = vld [vmem:[#allocation3 + $0x74] sm:$0xf]
    %v85 = vld [vmem:[#allocation3 + $0x78] sm:$0xf]
    %v86 = vld [vmem:[#allocation3 + $0x7c] sm:$0xf]
    %v87 = vld [vmem:[#allocation3 + $0x80] sm:$0xf]
    %v88 = vld [vmem:[#allocation3 + $0x84] sm:$0xf]
    %v89 = vld [vmem:[#allocation3 + $0x88] sm:$0xf]
    %v90 = vld [vmem:[#allocation3 + $0x8c] sm:$0xf]
    %v91 = vld [vmem:[#allocation3 + $0x90] sm:$0xf]
    %v92 = vld [vmem:[#allocation3 + $0x94] sm:$0xf]
    %v93 = vld [vmem:[#allocation3 + $0x98] sm:$0xf]
    %v94 = vld [vmem:[#allocation3 + $0x9c] sm:$0xf]
    %v95 = vld [vmem:[#allocation3 + $0xa0] sm:$0xf]
    %v96 = vld [vmem:[#allocation3 + $0xa4] sm:$0xf]
    %v97 = vld [vmem:[#allocation3 + $0xa8] sm:$0xf]
    %v98 = vld [vmem:[#allocation3 + $0xac] sm:$0xf]
    %v99 = vld [vmem:[#allocation3 + $0xb0] sm:$0xf]
    %v100 = vld [vmem:[#allocation3 + $0xb4] sm:$0xf]
    %v101 = vld [vmem:[#allocation3 + $0xb8] sm:$0xf]
    %v102 = vld [vmem:[#allocation3 + $0xbc] sm:$0xf]
    %v103 = vld [vmem:[#allocation3 + $0xc0] sm:$0xf]
    %v104 = vld [vmem:[#allocation3 + $0xc4] sm:$0xf]
    %v105 = vld [vmem:[#allocation3 + $0xc8] sm:$0xf]
    %v106 = vld [vmem:[#allocation3 + $0xcc] sm:$0xf]
    %v107 = vld [vmem:[#allocation3 + $0xd0] sm:$0xf]
    %v108 = vld [vmem:[#allocation3 + $0xd4] sm:$0xf]
    %v109 = vld [vmem:[#allocation3 + $0xd8] sm:$0xf]
    %v110 = vld [vmem:[#allocation3 + $0xdc] sm:$0xf]
    %v111 = vld [vmem:[#allocation3 + $0xe0] sm:$0xf]
    %v112 = vld [vmem:[#allocation3 + $0xe4] sm:$0xf]
    %v113 = vld [vmem:[#allocation3 + $0xe8] sm:$0xf]
    %v114 = vld [vmem:[#allocation3 + $0xec] sm:$0xf]
    %v115 = vld [vmem:[#allocation3 + $0xf0] sm:$0xf]
    %v116 = vld [vmem:[#allocation3 + $0xf4] sm:$0xf]
    %v117 = vld [vmem:[#allocation3 + $0xf8] sm:$0xf]
    %v118 = vld [vmem:[#allocation3 + $0xfc] sm:$0xf]
    %v119 = vld [vmem:[#allocation3 + $0x100] sm:$0xf]
    %v120 = vld [vmem:[#allocation3 + $0x104] sm:$0xf]
    %v121 = vld [vmem:[#allocation3 + $0x108] sm:$0xf]
    %v122 = vld [vmem:[#allocation3 + $0x10c] sm:$0xf]
    %v123 = vld [vmem:[#allocation3 + $0x110] sm:$0xf]
    %v124 = vld [vmem:[#allocation3 + $0x114] sm:$0xf]
    %v125 = vld [vmem:[#allocation3 + $0x118] sm:$0xf]
    %v126 = vld [vmem:[#allocation3 + $0x11c] sm:$0xf]
    %v127 = vld [vmem:[#allocation3 + $0x120] sm:$0xf]
    %v128 = vld [vmem:[#allocation3 + $0x124] sm:$0xf]
    %v129 = vld [vmem:[#allocation3 + $0x128] sm:$0xf]
    %v130 = vld [vmem:[#allocation3 + $0x12c] sm:$0xf]
    %v131 = vld [vmem:[#allocation3 + $0x130] sm:$0xf]
    %v132 = vld [vmem:[#allocation3 + $0x134] sm:$0xf]
    %v133 = vld [vmem:[#allocation3 + $0x138] sm:$0xf]
    %v134 = vld [vmem:[#allocation3 + $0x13c] sm:$0xf]
    %v135 = vld [vmem:[#allocation3 + $0x140] sm:$0xf]
    %v136 = vld [vmem:[#allocation3 + $0x144] sm:$0xf]
    %v137 = vld [vmem:[#allocation3 + $0x148] sm:$0xf]
    %v138 = vld [vmem:[#allocation3 + $0x14c] sm:$0xf]
    %v139 = vld [vmem:[#allocation3 + $0x150] sm:$0xf]
    %v140 = vld [vmem:[#allocation3 + $0x154] sm:$0xf]
    %v141 = vld [vmem:[#allocation3 + $0x158] sm:$0xf]
    %v142 = vld [vmem:[#allocation3 + $0x15c] sm:$0xf]
    %v143 = vld [vmem:[#allocation3 + $0x160] sm:$0xf]
    %v144 = vld [vmem:[#allocation3 + $0x164] sm:$0xf]
    %v145 = vld [vmem:[#allocation3 + $0x168] sm:$0xf]
    %v146 = vld [vmem:[#allocation3 + $0x16c] sm:$0xf]
    %v147 = vld [vmem:[#allocation3 + $0x170] sm:$0xf]
    %v148 = vld [vmem:[#allocation3 + $0x174] sm:$0xf]
    %v149 = vld [vmem:[#allocation3 + $0x178] sm:$0xf]
    %v150 = vld [vmem:[#allocation3 + $0x17c] sm:$0xf]
    %v151 = vld [vmem:[#allocation3 + $0x180] sm:$0xf]
    %v152 = vld [vmem:[#allocation3 + $0x184] sm:$0xf]
    %v153 = vld [vmem:[#allocation3 + $0x188] sm:$0xf]
    %v154 = vld [vmem:[#allocation3 + $0x18c] sm:$0xf]
    %v155 = vld [vmem:[#allocation3 + $0x190] sm:$0xf]
    %v156 = vld [vmem:[#allocation3 + $0x194] sm:$0xf]
    %v157 = vld [vmem:[#allocation3 + $0x198] sm:$0xf]
    %v158 = vld [vmem:[#allocation3 + $0x19c] sm:$0xf]
    %v159 = vld [vmem:[#allocation3 + $0x1a0] sm:$0xf]
    %v160 = vld [vmem:[#allocation3 + $0x1a4] sm:$0xf]
    %v161 = vld [vmem:[#allocation3 + $0x1a8] sm:$0xf]
    %v162 = vld [vmem:[#allocation3 + $0x1ac] sm:$0xf]
    %v163 = vld [vmem:[#allocation3 + $0x1b0] sm:$0xf]
    %v164 = vld [vmem:[#allocation3 + $0x1b4] sm:$0xf]
    %v165 = vld [vmem:[#allocation3 + $0x1b8] sm:$0xf]
    %v166 = vld [vmem:[#allocation3 + $0x1bc] sm:$0xf]
    %v167 = vld [vmem:[#allocation3 + $0x1c0] sm:$0xf]
    %v168 = vld [vmem:[#allocation3 + $0x1c4] sm:$0xf]
    %v169 = vld [vmem:[#allocation3 + $0x1c8] sm:$0xf]
    %v170 = vld [vmem:[#allocation3 + $0x1cc] sm:$0xf]
    %v171 = vld [vmem:[#allocation3 + $0x1d0] sm:$0xf]
    %v172 = vld [vmem:[#allocation3 + $0x1d4] sm:$0xf]
    %v173 = vld [vmem:[#allocation3 + $0x1d8] sm:$0xf]
    %v174 = vld [vmem:[#allocation3 + $0x1dc] sm:$0xf]
    %v175 = vld [vmem:[#allocation3 + $0x1e0] sm:$0xf]
    %v176 = vld [vmem:[#allocation3 + $0x1e4] sm:$0xf]
    %v177 = vld [vmem:[#allocation3 + $0x1e8] sm:$0xf]
    %v178 = vld [vmem:[#allocation3 + $0x1ec] sm:$0xf]
    %v179 = vld [vmem:[#allocation3 + $0x1f0] sm:$0xf]
    %v180 = vld [vmem:[#allocation3 + $0x1f4] sm:$0xf]
    %v181 = vld [vmem:[#allocation3 + $0x1f8] sm:$0xf]
    %v182 = vld [vmem:[#allocation3 + $0x1fc] sm:$0xf]
    %v183 = vunpack.c.l.bf16 %v55
    %v184 = vunpack.c.l.bf16 %v56
    %v185 = vunpack.c.l.bf16 %v57
    %v186 = vunpack.c.l.bf16 %v58
    %v187 = vunpack.c.l.bf16 %v59
    %v188 = vunpack.c.l.bf16 %v60
    %v189 = vunpack.c.l.bf16 %v61
    %v190 = vunpack.c.l.bf16 %v62
    %v191 = vunpack.c.l.bf16 %v63
    %v192 = vunpack.c.l.bf16 %v64
    %v193 = vunpack.c.l.bf16 %v65
    %v194 = vunpack.c.l.bf16 %v66
    %v195 = vunpack.c.l.bf16 %v67
    %v196 = vunpack.c.l.bf16 %v68
    %v197 = vunpack.c.l.bf16 %v69
    %v198 = vunpack.c.l.bf16 %v70
    %v199 = vunpack.c.l.bf16 %v71
    %v200 = vunpack.c.l.bf16 %v72
    %v201 = vunpack.c.l.bf16 %v73
    %v202 = vunpack.c.l.bf16 %v74
    %v203 = vunpack.c.l.bf16 %v75
    %v204 = vunpack.c.l.bf16 %v76
    %v205 = vunpack.c.l.bf16 %v77
    %v206 = vunpack.c.l.bf16 %v78
    %v207 = vunpack.c.l.bf16 %v79
    %v208 = vunpack.c.l.bf16 %v80
    %v209 = vunpack.c.l.bf16 %v81
    %v210 = vunpack.c.l.bf16 %v82
    %v211 = vunpack.c.l.bf16 %v83
    %v212 = vunpack.c.l.bf16 %v84
    %v213 = vunpack.c.l.bf16 %v85
    %v214 = vunpack.c.l.bf16 %v86
    %v215 = vunpack.c.l.bf16 %v87
    %v216 = vunpack.c.l.bf16 %v88
    %v217 = vunpack.c.l.bf16 %v89
    %v218 = vunpack.c.l.bf16 %v90
    %v219 = vunpack.c.l.bf16 %v91
    %v220 = vunpack.c.l.bf16 %v92
    %v221 = vunpack.c.l.bf16 %v93
    %v222 = vunpack.c.l.bf16 %v94
    %v223 = vunpack.c.l.bf16 %v95
    %v224 = vunpack.c.l.bf16 %v96
    %v225 = vunpack.c.l.bf16 %v97
    %v226 = vunpack.c.l.bf16 %v98
    %v227 = vunpack.c.l.bf16 %v99
    %v228 = vunpack.c.l.bf16 %v100
    %v229 = vunpack.c.l.bf16 %v101
    %v230 = vunpack.c.l.bf16 %v102
    %v231 = vunpack.c.l.bf16 %v103
    %v232 = vunpack.c.l.bf16 %v104
    %v233 = vunpack.c.l.bf16 %v105
    %v234 = vunpack.c.l.bf16 %v106
    %v235 = vunpack.c.l.bf16 %v107
    %v236 = vunpack.c.l.bf16 %v108
    %v237 = vunpack.c.l.bf16 %v109
    %v238 = vunpack.c.l.bf16 %v110
    %v239 = vunpack.c.l.bf16 %v111
    %v240 = vunpack.c.l.bf16 %v112
    %v241 = vunpack.c.l.bf16 %v113
    %v242 = vunpack.c.l.bf16 %v114
    %v243 = vunpack.c.l.bf16 %v115
    %v244 = vunpack.c.l.bf16 %v116
    %v245 = vunpack.c.l.bf16 %v117
    %v246 = vunpack.c.l.bf16 %v118
    %v247 = vunpack.c.l.bf16 %v119
    %v248 = vunpack.c.l.bf16 %v120
    %v249 = vunpack.c.l.bf16 %v121
    %v250 = vunpack.c.l.bf16 %v122
    %v251 = vunpack.c.l.bf16 %v123
    %v252 = vunpack.c.l.bf16 %v124
    %v253 = vunpack.c.l.bf16 %v125
    %v254 = vunpack.c.l.bf16 %v126
    %v255 = vunpack.c.l.bf16 %v127
    %v256 = vunpack.c.l.bf16 %v128
    %v257 = vunpack.c.l.bf16 %v129
    %v258 = vunpack.c.l.bf16 %v130
    %v259 = vunpack.c.l.bf16 %v131
    %v260 = vunpack.c.l.bf16 %v132
    %v261 = vunpack.c.l.bf16 %v133
    %v262 = vunpack.c.l.bf16 %v134
    %v263 = vunpack.c.l.bf16 %v135
    %v264 = vunpack.c.l.bf16 %v136
    %v265 = vunpack.c.l.bf16 %v137
    %v266 = vunpack.c.l.bf16 %v138
    %v267 = vunpack.c.l.bf16 %v139
    %v268 = vunpack.c.l.bf16 %v140
    %v269 = vunpack.c.l.bf16 %v141
    %v270 = vunpack.c.l.bf16 %v142
    %v271 = vunpack.c.l.bf16 %v143
    %v272 = vunpack.c.l.bf16 %v144
    %v273 = vunpack.c.l.bf16 %v145
    %v274 = vunpack.c.l.bf16 %v146
    %v275 = vunpack.c.l.bf16 %v147
    %v276 = vunpack.c.l.bf16 %v148
    %v277 = vunpack.c.l.bf16 %v149
    %v278 = vunpack.c.l.bf16 %v150
    %v279 = vunpack.c.l.bf16 %v151
    %v280 = vunpack.c.l.bf16 %v152
    %v281 = vunpack.c.l.bf16 %v153
    %v282 = vunpack.c.l.bf16 %v154
    %v283 = vunpack.c.l.bf16 %v155
    %v284 = vunpack.c.l.bf16 %v156
    %v285 = vunpack.c.l.bf16 %v157
    %v286 = vunpack.c.l.bf16 %v158
    %v287 = vunpack.c.l.bf16 %v159
    %v288 = vunpack.c.l.bf16 %v160
    %v289 = vunpack.c.l.bf16 %v161
    %v290 = vunpack.c.l.bf16 %v162
    %v291 = vunpack.c.l.bf16 %v163
    %v292 = vunpack.c.l.bf16 %v164
    %v293 = vunpack.c.l.bf16 %v165
    %v294 = vunpack.c.l.bf16 %v166
    %v295 = vunpack.c.l.bf16 %v167
    %v296 = vunpack.c.l.bf16 %v168
    %v297 = vunpack.c.l.bf16 %v169
    %v298 = vunpack.c.l.bf16 %v170
    %v299 = vunpack.c.l.bf16 %v171
    %v300 = vunpack.c.l.bf16 %v172
    %v301 = vunpack.c.l.bf16 %v173
    %v302 = vunpack.c.l.bf16 %v174
    %v303 = vunpack.c.l.bf16 %v175
    %v304 = vunpack.c.l.bf16 %v176
    %v305 = vunpack.c.l.bf16 %v177
    %v306 = vunpack.c.l.bf16 %v178
    %v307 = vunpack.c.l.bf16 %v179
    %v308 = vunpack.c.l.bf16 %v180
    %v309 = vunpack.c.l.bf16 %v181
    %v310 = vunpack.c.l.bf16 %v182
    %v311 = vrot.slane %v183, 4
    %v312 = vadd.f32 %v183, %v311
    %v313 = vrot.slane %v312, 2
    %v314 = vadd.f32 %v312, %v313
    %v315 = vrot.slane %v314, 1
    %v316 = vadd.f32 %v314, %v315
    %v317 = vrot.slane %v184, 4
    %v318 = vadd.f32 %v184, %v317
    %v319 = vrot.slane %v318, 2
    %v320 = vadd.f32 %v318, %v319
    %v321 = vrot.slane %v320, 1
    %v322 = vadd.f32 %v320, %v321
    %v323 = vrot.slane %v185, 4
    %v324 = vadd.f32 %v185, %v323
    %v325 = vrot.slane %v324, 2
    %v326 = vadd.f32 %v324, %v325
    %v327 = vrot.slane %v326, 1
    %v328 = vadd.f32 %v326, %v327
    %v329 = vrot.slane %v186, 4
    %v330 = vadd.f32 %v186, %v329
    %v331 = vrot.slane %v330, 2
    %v332 = vadd.f32 %v330, %v331
    %v333 = vrot.slane %v332, 1
    %v334 = vadd.f32 %v332, %v333
    %v335 = vrot.slane %v187, 4
    %v336 = vadd.f32 %v187, %v335
    %v337 = vrot.slane %v336, 2
    %v338 = vadd.f32 %v336, %v337
    %v339 = vrot.slane %v338, 1
    %v340 = vadd.f32 %v338, %v339
    %v341 = vrot.slane %v188, 4
    %v342 = vadd.f32 %v188, %v341
    %v343 = vrot.slane %v342, 2
    %v344 = vadd.f32 %v342, %v343
    %v345 = vrot.slane %v344, 1
    %v346 = vadd.f32 %v344, %v345
    %v347 = vrot.slane %v189, 4
    %v348 = vadd.f32 %v189, %v347
    %v349 = vrot.slane %v348, 2
    %v350 = vadd.f32 %v348, %v349
    %v351 = vrot.slane %v350, 1
    %v352 = vadd.f32 %v350, %v351
    %v353 = vrot.slane %v190, 4
    %v354 = vadd.f32 %v190, %v353
    %v355 = vrot.slane %v354, 2
    %v356 = vadd.f32 %v354, %v355
    %v357 = vrot.slane %v356, 1
    %v358 = vadd.f32 %v356, %v357
    %v359 = vrot.slane %v191, 4
    %v360 = vadd.f32 %v191, %v359
    %v361 = vrot.slane %v360, 2
    %v362 = vadd.f32 %v360, %v361
    %v363 = vrot.slane %v362, 1
    %v364 = vadd.f32 %v362, %v363
    %v365 = vrot.slane %v192, 4
    %v366 = vadd.f32 %v192, %v365
    %v367 = vrot.slane %v366, 2
    %v368 = vadd.f32 %v366, %v367
    %v369 = vrot.slane %v368, 1
    %v370 = vadd.f32 %v368, %v369
    %v371 = vrot.slane %v193, 4
    %v372 = vadd.f32 %v193, %v371
    %v373 = vrot.slane %v372, 2
    %v374 = vadd.f32 %v372, %v373
    %v375 = vrot.slane %v374, 1
    %v376 = vadd.f32 %v374, %v375
    %v377 = vrot.slane %v194, 4
    %v378 = vadd.f32 %v194, %v377
    %v379 = vrot.slane %v378, 2
    %v380 = vadd.f32 %v378, %v379
    %v381 = vrot.slane %v380, 1
    %v382 = vadd.f32 %v380, %v381
    %v383 = vrot.slane %v195, 4
    %v384 = vadd.f32 %v195, %v383
    %v385 = vrot.slane %v384, 2
    %v386 = vadd.f32 %v384, %v385
    %v387 = vrot.slane %v386, 1
    %v388 = vadd.f32 %v386, %v387
    %v389 = vrot.slane %v196, 4
    %v390 = vadd.f32 %v196, %v389
    %v391 = vrot.slane %v390, 2
    %v392 = vadd.f32 %v390, %v391
    %v393 = vrot.slane %v392, 1
    %v394 = vadd.f32 %v392, %v393
    %v395 = vrot.slane %v197, 4
    %v396 = vadd.f32 %v197, %v395
    %v397 = vrot.slane %v396, 2
    %v398 = vadd.f32 %v396, %v397
    %v399 = vrot.slane %v398, 1
    %v400 = vadd.f32 %v398, %v399
    %v401 = vrot.slane %v198, 4
    %v402 = vadd.f32 %v198, %v401
    %v403 = vrot.slane %v402, 2
    %v404 = vadd.f32 %v402, %v403
    %v405 = vrot.slane %v404, 1
    %v406 = vadd.f32 %v404, %v405
    %v407 = vrot.slane %v199, 4
    %v408 = vadd.f32 %v199, %v407
    %v409 = vrot.slane %v408, 2
    %v410 = vadd.f32 %v408, %v409
    %v411 = vrot.slane %v410, 1
    %v412 = vadd.f32 %v410, %v411
    %v413 = vrot.slane %v200, 4
    %v414 = vadd.f32 %v200, %v413
    %v415 = vrot.slane %v414, 2
    %v416 = vadd.f32 %v414, %v415
    %v417 = vrot.slane %v416, 1
    %v418 = vadd.f32 %v416, %v417
    %v419 = vrot.slane %v201, 4
    %v420 = vadd.f32 %v201, %v419
    %v421 = vrot.slane %v420, 2
    %v422 = vadd.f32 %v420, %v421
    %v423 = vrot.slane %v422, 1
    %v424 = vadd.f32 %v422, %v423
    %v425 = vrot.slane %v202, 4
    %v426 = vadd.f32 %v202, %v425
    %v427 = vrot.slane %v426, 2
    %v428 = vadd.f32 %v426, %v427
    %v429 = vrot.slane %v428, 1
    %v430 = vadd.f32 %v428, %v429
    %v431 = vrot.slane %v203, 4
    %v432 = vadd.f32 %v203, %v431
    %v433 = vrot.slane %v432, 2
    %v434 = vadd.f32 %v432, %v433
    %v435 = vrot.slane %v434, 1
    %v436 = vadd.f32 %v434, %v435
    %v437 = vrot.slane %v204, 4
    %v438 = vadd.f32 %v204, %v437
    %v439 = vrot.slane %v438, 2
    %v440 = vadd.f32 %v438, %v439
    %v441 = vrot.slane %v440, 1
    %v442 = vadd.f32 %v440, %v441
    %v443 = vrot.slane %v205, 4
    %v444 = vadd.f32 %v205, %v443
    %v445 = vrot.slane %v444, 2
    %v446 = vadd.f32 %v444, %v445
    %v447 = vrot.slane %v446, 1
    %v448 = vadd.f32 %v446, %v447
    %v449 = vrot.slane %v206, 4
    %v450 = vadd.f32 %v206, %v449
    %v451 = vrot.slane %v450, 2
    %v452 = vadd.f32 %v450, %v451
    %v453 = vrot.slane %v452, 1
    %v454 = vadd.f32 %v452, %v453
    %v455 = vrot.slane %v207, 4
    %v456 = vadd.f32 %v207, %v455
    %v457 = vrot.slane %v456, 2
    %v458 = vadd.f32 %v456, %v457
    %v459 = vrot.slane %v458, 1
    %v460 = vadd.f32 %v458, %v459
    %v461 = vrot.slane %v208, 4
    %v462 = vadd.f32 %v208, %v461
    %v463 = vrot.slane %v462, 2
    %v464 = vadd.f32 %v462, %v463
    %v465 = vrot.slane %v464, 1
    %v466 = vadd.f32 %v464, %v465
    %v467 = vrot.slane %v209, 4
    %v468 = vadd.f32 %v209, %v467
    %v469 = vrot.slane %v468, 2
    %v470 = vadd.f32 %v468, %v469
    %v471 = vrot.slane %v470, 1
    %v472 = vadd.f32 %v470, %v471
    %v473 = vrot.slane %v210, 4
    %v474 = vadd.f32 %v210, %v473
    %v475 = vrot.slane %v474, 2
    %v476 = vadd.f32 %v474, %v475
    %v477 = vrot.slane %v476, 1
    %v478 = vadd.f32 %v476, %v477
    %v479 = vrot.slane %v211, 4
    %v480 = vadd.f32 %v211, %v479
    %v481 = vrot.slane %v480, 2
    %v482 = vadd.f32 %v480, %v481
    %v483 = vrot.slane %v482, 1
    %v484 = vadd.f32 %v482, %v483
    %v485 = vrot.slane %v212, 4
    %v486 = vadd.f32 %v212, %v485
    %v487 = vrot.slane %v486, 2
    %v488 = vadd.f32 %v486, %v487
    %v489 = vrot.slane %v488, 1
    %v490 = vadd.f32 %v488, %v489
    %v491 = vrot.slane %v213, 4
    %v492 = vadd.f32 %v213, %v491
    %v493 = vrot.slane %v492, 2
    %v494 = vadd.f32 %v492, %v493
    %v495 = vrot.slane %v494, 1
    %v496 = vadd.f32 %v494, %v495
    %v497 = vrot.slane %v214, 4
    %v498 = vadd.f32 %v214, %v497
    %v499 = vrot.slane %v498, 2
    %v500 = vadd.f32 %v498, %v499
    %v501 = vrot.slane %v500, 1
    %v502 = vadd.f32 %v500, %v501
    %v503 = vrot.slane %v215, 4
    %v504 = vadd.f32 %v215, %v503
    %v505 = vrot.slane %v504, 2
    %v506 = vadd.f32 %v504, %v505
    %v507 = vrot.slane %v506, 1
    %v508 = vadd.f32 %v506, %v507
    %v509 = vrot.slane %v216, 4
    %v510 = vadd.f32 %v216, %v509
    %v511 = vrot.slane %v510, 2
    %v512 = vadd.f32 %v510, %v511
    %v513 = vrot.slane %v512, 1
    %v514 = vadd.f32 %v512, %v513
    %v515 = vrot.slane %v217, 4
    %v516 = vadd.f32 %v217, %v515
    %v517 = vrot.slane %v516, 2
    %v518 = vadd.f32 %v516, %v517
    %v519 = vrot.slane %v518, 1
    %v520 = vadd.f32 %v518, %v519
    %v521 = vrot.slane %v218, 4
    %v522 = vadd.f32 %v218, %v521
    %v523 = vrot.slane %v522, 2
    %v524 = vadd.f32 %v522, %v523
    %v525 = vrot.slane %v524, 1
    %v526 = vadd.f32 %v524, %v525
    %v527 = vrot.slane %v219, 4
    %v528 = vadd.f32 %v219, %v527
    %v529 = vrot.slane %v528, 2
    %v530 = vadd.f32 %v528, %v529
    %v531 = vrot.slane %v530, 1
    %v532 = vadd.f32 %v530, %v531
    %v533 = vrot.slane %v220, 4
    %v534 = vadd.f32 %v220, %v533
    %v535 = vrot.slane %v534, 2
    %v536 = vadd.f32 %v534, %v535
    %v537 = vrot.slane %v536, 1
    %v538 = vadd.f32 %v536, %v537
    %v539 = vrot.slane %v221, 4
    %v540 = vadd.f32 %v221, %v539
    %v541 = vrot.slane %v540, 2
    %v542 = vadd.f32 %v540, %v541
    %v543 = vrot.slane %v542, 1
    %v544 = vadd.f32 %v542, %v543
    %v545 = vrot.slane %v222, 4
    %v546 = vadd.f32 %v222, %v545
    %v547 = vrot.slane %v546, 2
    %v548 = vadd.f32 %v546, %v547
    %v549 = vrot.slane %v548, 1
    %v550 = vadd.f32 %v548, %v549
    %v551 = vrot.slane %v223, 4
    %v552 = vadd.f32 %v223, %v551
    %v553 = vrot.slane %v552, 2
    %v554 = vadd.f32 %v552, %v553
    %v555 = vrot.slane %v554, 1
    %v556 = vadd.f32 %v554, %v555
    %v557 = vrot.slane %v224, 4
    %v558 = vadd.f32 %v224, %v557
    %v559 = vrot.slane %v558, 2
    %v560 = vadd.f32 %v558, %v559
    %v561 = vrot.slane %v560, 1
    %v562 = vadd.f32 %v560, %v561
    %v563 = vrot.slane %v225, 4
    %v564 = vadd.f32 %v225, %v563
    %v565 = vrot.slane %v564, 2
    %v566 = vadd.f32 %v564, %v565
    %v567 = vrot.slane %v566, 1
    %v568 = vadd.f32 %v566, %v567
    %v569 = vrot.slane %v226, 4
    %v570 = vadd.f32 %v226, %v569
    %v571 = vrot.slane %v570, 2
    %v572 = vadd.f32 %v570, %v571
    %v573 = vrot.slane %v572, 1
    %v574 = vadd.f32 %v572, %v573
    %v575 = vrot.slane %v227, 4
    %v576 = vadd.f32 %v227, %v575
    %v577 = vrot.slane %v576, 2
    %v578 = vadd.f32 %v576, %v577
    %v579 = vrot.slane %v578, 1
    %v580 = vadd.f32 %v578, %v579
    %v581 = vrot.slane %v228, 4
    %v582 = vadd.f32 %v228, %v581
    %v583 = vrot.slane %v582, 2
    %v584 = vadd.f32 %v582, %v583
    %v585 = vrot.slane %v584, 1
    %v586 = vadd.f32 %v584, %v585
    %v587 = vrot.slane %v229, 4
    %v588 = vadd.f32 %v229, %v587
    %v589 = vrot.slane %v588, 2
    %v590 = vadd.f32 %v588, %v589
    %v591 = vrot.slane %v590, 1
    %v592 = vadd.f32 %v590, %v591
    %v593 = vrot.slane %v230, 4
    %v594 = vadd.f32 %v230, %v593
    %v595 = vrot.slane %v594, 2
    %v596 = vadd.f32 %v594, %v595
    %v597 = vrot.slane %v596, 1
    %v598 = vadd.f32 %v596, %v597
    %v599 = vrot.slane %v231, 4
    %v600 = vadd.f32 %v231, %v599
    %v601 = vrot.slane %v600, 2
    %v602 = vadd.f32 %v600, %v601
    %v603 = vrot.slane %v602, 1
    %v604 = vadd.f32 %v602, %v603
    %v605 = vrot.slane %v232, 4
    %v606 = vadd.f32 %v232, %v605
    %v607 = vrot.slane %v606, 2
    %v608 = vadd.f32 %v606, %v607
    %v609 = vrot.slane %v608, 1
    %v610 = vadd.f32 %v608, %v609
    %v611 = vrot.slane %v233, 4
    %v612 = vadd.f32 %v233, %v611
    %v613 = vrot.slane %v612, 2
    %v614 = vadd.f32 %v612, %v613
    %v615 = vrot.slane %v614, 1
    %v616 = vadd.f32 %v614, %v615
    %v617 = vrot.slane %v234, 4
    %v618 = vadd.f32 %v234, %v617
    %v619 = vrot.slane %v618, 2
    %v620 = vadd.f32 %v618, %v619
    %v621 = vrot.slane %v620, 1
    %v622 = vadd.f32 %v620, %v621
    %v623 = vrot.slane %v235, 4
    %v624 = vadd.f32 %v235, %v623
    %v625 = vrot.slane %v624, 2
    %v626 = vadd.f32 %v624, %v625
    %v627 = vrot.slane %v626, 1
    %v628 = vadd.f32 %v626, %v627
    %v629 = vrot.slane %v236, 4
    %v630 = vadd.f32 %v236, %v629
    %v631 = vrot.slane %v630, 2
    %v632 = vadd.f32 %v630, %v631
    %v633 = vrot.slane %v632, 1
    %v634 = vadd.f32 %v632, %v633
    %v635 = vrot.slane %v237, 4
    %v636 = vadd.f32 %v237, %v635
    %v637 = vrot.slane %v636, 2
    %v638 = vadd.f32 %v636, %v637
    %v639 = vrot.slane %v638, 1
    %v640 = vadd.f32 %v638, %v639
    %v641 = vrot.slane %v238, 4
    %v642 = vadd.f32 %v238, %v641
    %v643 = vrot.slane %v642, 2
    %v644 = vadd.f32 %v642, %v643
    %v645 = vrot.slane %v644, 1
    %v646 = vadd.f32 %v644, %v645
    %v647 = vrot.slane %v239, 4
    %v648 = vadd.f32 %v239, %v647
    %v649 = vrot.slane %v648, 2
    %v650 = vadd.f32 %v648, %v649
    %v651 = vrot.slane %v650, 1
    %v652 = vadd.f32 %v650, %v651
    %v653 = vrot.slane %v240, 4
    %v654 = vadd.f32 %v240, %v653
    %v655 = vrot.slane %v654, 2
    %v656 = vadd.f32 %v654, %v655
    %v657 = vrot.slane %v656, 1
    %v658 = vadd.f32 %v656, %v657
    %v659 = vrot.slane %v241, 4
    %v660 = vadd.f32 %v241, %v659
    %v661 = vrot.slane %v660, 2
    %v662 = vadd.f32 %v660, %v661
    %v663 = vrot.slane %v662, 1
    %v664 = vadd.f32 %v662, %v663
    %v665 = vrot.slane %v242, 4
    %v666 = vadd.f32 %v242, %v665
    %v667 = vrot.slane %v666, 2
    %v668 = vadd.f32 %v666, %v667
    %v669 = vrot.slane %v668, 1
    %v670 = vadd.f32 %v668, %v669
    %v671 = vrot.slane %v243, 4
    %v672 = vadd.f32 %v243, %v671
    %v673 = vrot.slane %v672, 2
    %v674 = vadd.f32 %v672, %v673
    %v675 = vrot.slane %v674, 1
    %v676 = vadd.f32 %v674, %v675
    %v677 = vrot.slane %v244, 4
    %v678 = vadd.f32 %v244, %v677
    %v679 = vrot.slane %v678, 2
    %v680 = vadd.f32 %v678, %v679
    %v681 = vrot.slane %v680, 1
    %v682 = vadd.f32 %v680, %v681
    %v683 = vrot.slane %v245, 4
    %v684 = vadd.f32 %v245, %v683
    %v685 = vrot.slane %v684, 2
    %v686 = vadd.f32 %v684, %v685
    %v687 = vrot.slane %v686, 1
    %v688 = vadd.f32 %v686, %v687
    %v689 = vrot.slane %v246, 4
    %v690 = vadd.f32 %v246, %v689
    %v691 = vrot.slane %v690, 2
    %v692 = vadd.f32 %v690, %v691
    %v693 = vrot.slane %v692, 1
    %v694 = vadd.f32 %v692, %v693
    %v695 = vrot.slane %v247, 4
    %v696 = vadd.f32 %v247, %v695
    %v697 = vrot.slane %v696, 2
    %v698 = vadd.f32 %v696, %v697
    %v699 = vrot.slane %v698, 1
    %v700 = vadd.f32 %v698, %v699
    %v701 = vrot.slane %v248, 4
    %v702 = vadd.f32 %v248, %v701
    %v703 = vrot.slane %v702, 2
    %v704 = vadd.f32 %v702, %v703
    %v705 = vrot.slane %v704, 1
    %v706 = vadd.f32 %v704, %v705
    %v707 = vrot.slane %v249, 4
    %v708 = vadd.f32 %v249, %v707
    %v709 = vrot.slane %v708, 2
    %v710 = vadd.f32 %v708, %v709
    %v711 = vrot.slane %v710, 1
    %v712 = vadd.f32 %v710, %v711
    %v713 = vrot.slane %v250, 4
    %v714 = vadd.f32 %v250, %v713
    %v715 = vrot.slane %v714, 2
    %v716 = vadd.f32 %v714, %v715
    %v717 = vrot.slane %v716, 1
    %v718 = vadd.f32 %v716, %v717
    %v719 = vrot.slane %v251, 4
    %v720 = vadd.f32 %v251, %v719
    %v721 = vrot.slane %v720, 2
    %v722 = vadd.f32 %v720, %v721
    %v723 = vrot.slane %v722, 1
    %v724 = vadd.f32 %v722, %v723
    %v725 = vrot.slane %v252, 4
    %v726 = vadd.f32 %v252, %v725
    %v727 = vrot.slane %v726, 2
    %v728 = vadd.f32 %v726, %v727
    %v729 = vrot.slane %v728, 1
    %v730 = vadd.f32 %v728, %v729
    %v731 = vrot.slane %v253, 4
    %v732 = vadd.f32 %v253, %v731
    %v733 = vrot.slane %v732, 2
    %v734 = vadd.f32 %v732, %v733
    %v735 = vrot.slane %v734, 1
    %v736 = vadd.f32 %v734, %v735
    %v737 = vrot.slane %v254, 4
    %v738 = vadd.f32 %v254, %v737
    %v739 = vrot.slane %v738, 2
    %v740 = vadd.f32 %v738, %v739
    %v741 = vrot.slane %v740, 1
    %v742 = vadd.f32 %v740, %v741
    %v743 = vrot.slane %v255, 4
    %v744 = vadd.f32 %v255, %v743
    %v745 = vrot.slane %v744, 2
    %v746 = vadd.f32 %v744, %v745
    %v747 = vrot.slane %v746, 1
    %v748 = vadd.f32 %v746, %v747
    %v749 = vrot.slane %v256, 4
    %v750 = vadd.f32 %v256, %v749
    %v751 = vrot.slane %v750, 2
    %v752 = vadd.f32 %v750, %v751
    %v753 = vrot.slane %v752, 1
    %v754 = vadd.f32 %v752, %v753
    %v755 = vrot.slane %v257, 4
    %v756 = vadd.f32 %v257, %v755
    %v757 = vrot.slane %v756, 2
    %v758 = vadd.f32 %v756, %v757
    %v759 = vrot.slane %v758, 1
    %v760 = vadd.f32 %v758, %v759
    %v761 = vrot.slane %v258, 4
    %v762 = vadd.f32 %v258, %v761
    %v763 = vrot.slane %v762, 2
    %v764 = vadd.f32 %v762, %v763
    %v765 = vrot.slane %v764, 1
    %v766 = vadd.f32 %v764, %v765
    %v767 = vrot.slane %v259, 4
    %v768 = vadd.f32 %v259, %v767
    %v769 = vrot.slane %v768, 2
    %v770 = vadd.f32 %v768, %v769
    %v771 = vrot.slane %v770, 1
    %v772 = vadd.f32 %v770, %v771
    %v773 = vrot.slane %v260, 4
    %v774 = vadd.f32 %v260, %v773
    %v775 = vrot.slane %v774, 2
    %v776 = vadd.f32 %v774, %v775
    %v777 = vrot.slane %v776, 1
    %v778 = vadd.f32 %v776, %v777
    %v779 = vrot.slane %v261, 4
    %v780 = vadd.f32 %v261, %v779
    %v781 = vrot.slane %v780, 2
    %v782 = vadd.f32 %v780, %v781
    %v783 = vrot.slane %v782, 1
    %v784 = vadd.f32 %v782, %v783
    %v785 = vrot.slane %v262, 4
    %v786 = vadd.f32 %v262, %v785
    %v787 = vrot.slane %v786, 2
    %v788 = vadd.f32 %v786, %v787
    %v789 = vrot.slane %v788, 1
    %v790 = vadd.f32 %v788, %v789
    %v791 = vrot.slane %v263, 4
    %v792 = vadd.f32 %v263, %v791
    %v793 = vrot.slane %v792, 2
    %v794 = vadd.f32 %v792, %v793
    %v795 = vrot.slane %v794, 1
    %v796 = vadd.f32 %v794, %v795
    %v797 = vrot.slane %v264, 4
    %v798 = vadd.f32 %v264, %v797
    %v799 = vrot.slane %v798, 2
    %v800 = vadd.f32 %v798, %v799
    %v801 = vrot.slane %v800, 1
    %v802 = vadd.f32 %v800, %v801
    %v803 = vrot.slane %v265, 4
    %v804 = vadd.f32 %v265, %v803
    %v805 = vrot.slane %v804, 2
    %v806 = vadd.f32 %v804, %v805
    %v807 = vrot.slane %v806, 1
    %v808 = vadd.f32 %v806, %v807
    %v809 = vrot.slane %v266, 4
    %v810 = vadd.f32 %v266, %v809
    %v811 = vrot.slane %v810, 2
    %v812 = vadd.f32 %v810, %v811
    %v813 = vrot.slane %v812, 1
    %v814 = vadd.f32 %v812, %v813
    %v815 = vrot.slane %v267, 4
    %v816 = vadd.f32 %v267, %v815
    %v817 = vrot.slane %v816, 2
    %v818 = vadd.f32 %v816, %v817
    %v819 = vrot.slane %v818, 1
    %v820 = vadd.f32 %v818, %v819
    %v821 = vrot.slane %v268, 4
    %v822 = vadd.f32 %v268, %v821
    %v823 = vrot.slane %v822, 2
    %v824 = vadd.f32 %v822, %v823
    %v825 = vrot.slane %v824, 1
    %v826 = vadd.f32 %v824, %v825
    %v827 = vrot.slane %v269, 4
    %v828 = vadd.f32 %v269, %v827
    %v829 = vrot.slane %v828, 2
    %v830 = vadd.f32 %v828, %v829
    %v831 = vrot.slane %v830, 1
    %v832 = vadd.f32 %v830, %v831
    %v833 = vrot.slane %v270, 4
    %v834 = vadd.f32 %v270, %v833
    %v835 = vrot.slane %v834, 2
    %v836 = vadd.f32 %v834, %v835
    %v837 = vrot.slane %v836, 1
    %v838 = vadd.f32 %v836, %v837
    %v839 = vrot.slane %v271, 4
    %v840 = vadd.f32 %v271, %v839
    %v841 = vrot.slane %v840, 2
    %v842 = vadd.f32 %v840, %v841
    %v843 = vrot.slane %v842, 1
    %v844 = vadd.f32 %v842, %v843
    %v845 = vrot.slane %v272, 4
    %v846 = vadd.f32 %v272, %v845
    %v847 = vrot.slane %v846, 2
    %v848 = vadd.f32 %v846, %v847
    %v849 = vrot.slane %v848, 1
    %v850 = vadd.f32 %v848, %v849
    %v851 = vrot.slane %v273, 4
    %v852 = vadd.f32 %v273, %v851
    %v853 = vrot.slane %v852, 2
    %v854 = vadd.f32 %v852, %v853
    %v855 = vrot.slane %v854, 1
    %v856 = vadd.f32 %v854, %v855
    %v857 = vrot.slane %v274, 4
    %v858 = vadd.f32 %v274, %v857
    %v859 = vrot.slane %v858, 2
    %v860 = vadd.f32 %v858, %v859
    %v861 = vrot.slane %v860, 1
    %v862 = vadd.f32 %v860, %v861
    %v863 = vrot.slane %v275, 4
    %v864 = vadd.f32 %v275, %v863
    %v865 = vrot.slane %v864, 2
    %v866 = vadd.f32 %v864, %v865
    %v867 = vrot.slane %v866, 1
    %v868 = vadd.f32 %v866, %v867
    %v869 = vrot.slane %v276, 4
    %v870 = vadd.f32 %v276, %v869
    %v871 = vrot.slane %v870, 2
    %v872 = vadd.f32 %v870, %v871
    %v873 = vrot.slane %v872, 1
    %v874 = vadd.f32 %v872, %v873
    %v875 = vrot.slane %v277, 4
    %v876 = vadd.f32 %v277, %v875
    %v877 = vrot.slane %v876, 2
    %v878 = vadd.f32 %v876, %v877
    %v879 = vrot.slane %v878, 1
    %v880 = vadd.f32 %v878, %v879
    %v881 = vrot.slane %v278, 4
    %v882 = vadd.f32 %v278, %v881
    %v883 = vrot.slane %v882, 2
    %v884 = vadd.f32 %v882, %v883
    %v885 = vrot.slane %v884, 1
    %v886 = vadd.f32 %v884, %v885
    %v887 = vrot.slane %v279, 4
    %v888 = vadd.f32 %v279, %v887
    %v889 = vrot.slane %v888, 2
    %v890 = vadd.f32 %v888, %v889
    %v891 = vrot.slane %v890, 1
    %v892 = vadd.f32 %v890, %v891
    %v893 = vrot.slane %v280, 4
    %v894 = vadd.f32 %v280, %v893
    %v895 = vrot.slane %v894, 2
    %v896 = vadd.f32 %v894, %v895
    %v897 = vrot.slane %v896, 1
    %v898 = vadd.f32 %v896, %v897
    %v899 = vrot.slane %v281, 4
    %v900 = vadd.f32 %v281, %v899
    %v901 = vrot.slane %v900, 2
    %v902 = vadd.f32 %v900, %v901
    %v903 = vrot.slane %v902, 1
    %v904 = vadd.f32 %v902, %v903
    %v905 = vrot.slane %v282, 4
    %v906 = vadd.f32 %v282, %v905
    %v907 = vrot.slane %v906, 2
    %v908 = vadd.f32 %v906, %v907
    %v909 = vrot.slane %v908, 1
    %v910 = vadd.f32 %v908, %v909
    %v911 = vrot.slane %v283, 4
    %v912 = vadd.f32 %v283, %v911
    %v913 = vrot.slane %v912, 2
    %v914 = vadd.f32 %v912, %v913
    %v915 = vrot.slane %v914, 1
    %v916 = vadd.f32 %v914, %v915
    %v917 = vrot.slane %v284, 4
    %v918 = vadd.f32 %v284, %v917
    %v919 = vrot.slane %v918, 2
    %v920 = vadd.f32 %v918, %v919
    %v921 = vrot.slane %v920, 1
    %v922 = vadd.f32 %v920, %v921
    %v923 = vrot.slane %v285, 4
    %v924 = vadd.f32 %v285, %v923
    %v925 = vrot.slane %v924, 2
    %v926 = vadd.f32 %v924, %v925
    %v927 = vrot.slane %v926, 1
    %v928 = vadd.f32 %v926, %v927
    %v929 = vrot.slane %v286, 4
    %v930 = vadd.f32 %v286, %v929
    %v931 = vrot.slane %v930, 2
    %v932 = vadd.f32 %v930, %v931
    %v933 = vrot.slane %v932, 1
    %v934 = vadd.f32 %v932, %v933
    %v935 = vrot.slane %v287, 4
    %v936 = vadd.f32 %v287, %v935
    %v937 = vrot.slane %v936, 2
    %v938 = vadd.f32 %v936, %v937
    %v939 = vrot.slane %v938, 1
    %v940 = vadd.f32 %v938, %v939
    %v941 = vrot.slane %v288, 4
    %v942 = vadd.f32 %v288, %v941
    %v943 = vrot.slane %v942, 2
    %v944 = vadd.f32 %v942, %v943
    %v945 = vrot.slane %v944, 1
    %v946 = vadd.f32 %v944, %v945
    %v947 = vrot.slane %v289, 4
    %v948 = vadd.f32 %v289, %v947
    %v949 = vrot.slane %v948, 2
    %v950 = vadd.f32 %v948, %v949
    %v951 = vrot.slane %v950, 1
    %v952 = vadd.f32 %v950, %v951
    %v953 = vrot.slane %v290, 4
    %v954 = vadd.f32 %v290, %v953
    %v955 = vrot.slane %v954, 2
    %v956 = vadd.f32 %v954, %v955
    %v957 = vrot.slane %v956, 1
    %v958 = vadd.f32 %v956, %v957
    %v959 = vrot.slane %v291, 4
    %v960 = vadd.f32 %v291, %v959
    %v961 = vrot.slane %v960, 2
    %v962 = vadd.f32 %v960, %v961
    %v963 = vrot.slane %v962, 1
    %v964 = vadd.f32 %v962, %v963
    %v965 = vrot.slane %v292, 4
    %v966 = vadd.f32 %v292, %v965
    %v967 = vrot.slane %v966, 2
    %v968 = vadd.f32 %v966, %v967
    %v969 = vrot.slane %v968, 1
    %v970 = vadd.f32 %v968, %v969
    %v971 = vrot.slane %v293, 4
    %v972 = vadd.f32 %v293, %v971
    %v973 = vrot.slane %v972, 2
    %v974 = vadd.f32 %v972, %v973
    %v975 = vrot.slane %v974, 1
    %v976 = vadd.f32 %v974, %v975
    %v977 = vrot.slane %v294, 4
    %v978 = vadd.f32 %v294, %v977
    %v979 = vrot.slane %v978, 2
    %v980 = vadd.f32 %v978, %v979
    %v981 = vrot.slane %v980, 1
    %v982 = vadd.f32 %v980, %v981
    %v983 = vrot.slane %v295, 4
    %v984 = vadd.f32 %v295, %v983
    %v985 = vrot.slane %v984, 2
    %v986 = vadd.f32 %v984, %v985
    %v987 = vrot.slane %v986, 1
    %v988 = vadd.f32 %v986, %v987
    %v989 = vrot.slane %v296, 4
    %v990 = vadd.f32 %v296, %v989
    %v991 = vrot.slane %v990, 2
    %v992 = vadd.f32 %v990, %v991
    %v993 = vrot.slane %v992, 1
    %v994 = vadd.f32 %v992, %v993
    %v995 = vrot.slane %v297, 4
    %v996 = vadd.f32 %v297, %v995
    %v997 = vrot.slane %v996, 2
    %v998 = vadd.f32 %v996, %v997
    %v999 = vrot.slane %v998, 1
    %v1000 = vadd.f32 %v998, %v999
    %v1001 = vrot.slane %v298, 4
    %v1002 = vadd.f32 %v298, %v1001
    %v1003 = vrot.slane %v1002, 2
    %v1004 = vadd.f32 %v1002, %v1003
    %v1005 = vrot.slane %v1004, 1
    %v1006 = vadd.f32 %v1004, %v1005
    %v1007 = vrot.slane %v299, 4
    %v1008 = vadd.f32 %v299, %v1007
    %v1009 = vrot.slane %v1008, 2
    %v1010 = vadd.f32 %v1008, %v1009
    %v1011 = vrot.slane %v1010, 1
    %v1012 = vadd.f32 %v1010, %v1011
    %v1013 = vrot.slane %v300, 4
    %v1014 = vadd.f32 %v300, %v1013
    %v1015 = vrot.slane %v1014, 2
    %v1016 = vadd.f32 %v1014, %v1015
    %v1017 = vrot.slane %v1016, 1
    %v1018 = vadd.f32 %v1016, %v1017
    %v1019 = vrot.slane %v301, 4
    %v1020 = vadd.f32 %v301, %v1019
    %v1021 = vrot.slane %v1020, 2
    %v1022 = vadd.f32 %v1020, %v1021
    %v1023 = vrot.slane %v1022, 1
    %v1024 = vadd.f32 %v1022, %v1023
    %v1025 = vrot.slane %v302, 4
    %v1026 = vadd.f32 %v302, %v1025
    %v1027 = vrot.slane %v1026, 2
    %v1028 = vadd.f32 %v1026, %v1027
    %v1029 = vrot.slane %v1028, 1
    %v1030 = vadd.f32 %v1028, %v1029
    %v1031 = vrot.slane %v303, 4
    %v1032 = vadd.f32 %v303, %v1031
    %v1033 = vrot.slane %v1032, 2
    %v1034 = vadd.f32 %v1032, %v1033
    %v1035 = vrot.slane %v1034, 1
    %v1036 = vadd.f32 %v1034, %v1035
    %v1037 = vrot.slane %v304, 4
    %v1038 = vadd.f32 %v304, %v1037
    %v1039 = vrot.slane %v1038, 2
    %v1040 = vadd.f32 %v1038, %v1039
    %v1041 = vrot.slane %v1040, 1
    %v1042 = vadd.f32 %v1040, %v1041
    %v1043 = vrot.slane %v305, 4
    %v1044 = vadd.f32 %v305, %v1043
    %v1045 = vrot.slane %v1044, 2
    %v1046 = vadd.f32 %v1044, %v1045
    %v1047 = vrot.slane %v1046, 1
    %v1048 = vadd.f32 %v1046, %v1047
    %v1049 = vrot.slane %v306, 4
    %v1050 = vadd.f32 %v306, %v1049
    %v1051 = vrot.slane %v1050, 2
    %v1052 = vadd.f32 %v1050, %v1051
    %v1053 = vrot.slane %v1052, 1
    %v1054 = vadd.f32 %v1052, %v1053
    %v1055 = vrot.slane %v307, 4
    %v1056 = vadd.f32 %v307, %v1055
    %v1057 = vrot.slane %v1056, 2
    %v1058 = vadd.f32 %v1056, %v1057
    %v1059 = vrot.slane %v1058, 1
    %v1060 = vadd.f32 %v1058, %v1059
    %v1061 = vrot.slane %v308, 4
    %v1062 = vadd.f32 %v308, %v1061
    %v1063 = vrot.slane %v1062, 2
    %v1064 = vadd.f32 %v1062, %v1063
    %v1065 = vrot.slane %v1064, 1
    %v1066 = vadd.f32 %v1064, %v1065
    %v1067 = vrot.slane %v309, 4
    %v1068 = vadd.f32 %v309, %v1067
    %v1069 = vrot.slane %v1068, 2
    %v1070 = vadd.f32 %v1068, %v1069
    %v1071 = vrot.slane %v1070, 1
    %v1072 = vadd.f32 %v1070, %v1071
    %v1073 = vrot.slane %v310, 4
    %v1074 = vadd.f32 %v310, %v1073
    %v1075 = vrot.slane %v1074, 2
    %v1076 = vadd.f32 %v1074, %v1075
    %v1077 = vrot.slane %v1076, 1
    %v1078 = vadd.f32 %v1076, %v1077
    %v1079 = vrcp.pop 8.0
    %v1080 = vmul.f32 8.0, %v1079
    %v1081 = vsub.f32 1.0, %v1080
    %v1082 = vmul.f32 %v1079, %v1081
    %v1083 = vadd.f32 %v1079, %v1082
    %vm1084 = vweird.f32 %v1079
    %v1085 = vsel %vm1084, %v1079, %v1083
    %v1086 = vmul.f32 %v316, %v1085
    %v1087 = vmul.f32 %v322, %v1085
    %v1088 = vmul.f32 %v328, %v1085
    %v1089 = vmul.f32 %v334, %v1085
    %v1090 = vmul.f32 %v340, %v1085
    %v1091 = vmul.f32 %v346, %v1085
    %v1092 = vmul.f32 %v352, %v1085
    %v1093 = vmul.f32 %v358, %v1085
    %v1094 = vmul.f32 %v364, %v1085
    %v1095 = vmul.f32 %v370, %v1085
    %v1096 = vmul.f32 %v376, %v1085
    %v1097 = vmul.f32 %v382, %v1085
    %v1098 = vmul.f32 %v388, %v1085
    %v1099 = vmul.f32 %v394, %v1085
    %v1100 = vmul.f32 %v400, %v1085
    %v1101 = vmul.f32 %v406, %v1085
    %v1102 = vmul.f32 %v412, %v1085
    %v1103 = vmul.f32 %v418, %v1085
    %v1104 = vmul.f32 %v424, %v1085
    %v1105 = vmul.f32 %v430, %v1085
    %v1106 = vmul.f32 %v436, %v1085
    %v1107 = vmul.f32 %v442, %v1085
    %v1108 = vmul.f32 %v448, %v1085
    %v1109 = vmul.f32 %v454, %v1085
    %v1110 = vmul.f32 %v460, %v1085
    %v1111 = vmul.f32 %v466, %v1085
    %v1112 = vmul.f32 %v472, %v1085
    %v1113 = vmul.f32 %v478, %v1085
    %v1114 = vmul.f32 %v484, %v1085
    %v1115 = vmul.f32 %v490, %v1085
    %v1116 = vmul.f32 %v496, %v1085
    %v1117 = vmul.f32 %v502, %v1085
    %v1118 = vmul.f32 %v508, %v1085
    %v1119 = vmul.f32 %v514, %v1085
    %v1120 = vmul.f32 %v520, %v1085
    %v1121 = vmul.f32 %v526, %v1085
    %v1122 = vmul.f32 %v532, %v1085
    %v1123 = vmul.f32 %v538, %v1085
    %v1124 = vmul.f32 %v544, %v1085
    %v1125 = vmul.f32 %v550, %v1085
    %v1126 = vmul.f32 %v556, %v1085
    %v1127 = vmul.f32 %v562, %v1085
    %v1128 = vmul.f32 %v568, %v1085
    %v1129 = vmul.f32 %v574, %v1085
    %v1130 = vmul.f32 %v580, %v1085
    %v1131 = vmul.f32 %v586, %v1085
    %v1132 = vmul.f32 %v592, %v1085
    %v1133 = vmul.f32 %v598, %v1085
    %v1134 = vmul.f32 %v604, %v1085
    %v1135 = vmul.f32 %v610, %v1085
    %v1136 = vmul.f32 %v616, %v1085
    %v1137 = vmul.f32 %v622, %v1085
    %v1138 = vmul.f32 %v628, %v1085
    %v1139 = vmul.f32 %v634, %v1085
    %v1140 = vmul.f32 %v640, %v1085
    %v1141 = vmul.f32 %v646, %v1085
    %v1142 = vmul.f32 %v652, %v1085
    %v1143 = vmul.f32 %v658, %v1085
    %v1144 = vmul.f32 %v664, %v1085
    %v1145 = vmul.f32 %v670, %v1085
    %v1146 = vmul.f32 %v676, %v1085
    %v1147 = vmul.f32 %v682, %v1085
    %v1148 = vmul.f32 %v688, %v1085
    %v1149 = vmul.f32 %v694, %v1085
    %v1150 = vmul.f32 %v700, %v1085
    %v1151 = vmul.f32 %v706, %v1085
    %v1152 = vmul.f32 %v712, %v1085
    %v1153 = vmul.f32 %v718, %v1085
    %v1154 = vmul.f32 %v724, %v1085
    %v1155 = vmul.f32 %v730, %v1085
    %v1156 = vmul.f32 %v736, %v1085
    %v1157 = vmul.f32 %v742, %v1085
    %v1158 = vmul.f32 %v748, %v1085
    %v1159 = vmul.f32 %v754, %v1085
    %v1160 = vmul.f32 %v760, %v1085
    %v1161 = vmul.f32 %v766, %v1085
    %v1162 = vmul.f32 %v772, %v1085
    %v1163 = vmul.f32 %v778, %v1085
    %v1164 = vmul.f32 %v784, %v1085
    %v1165 = vmul.f32 %v790, %v1085
    %v1166 = vmul.f32 %v796, %v1085
    %v1167 = vmul.f32 %v802, %v1085
    %v1168 = vmul.f32 %v808, %v1085
    %v1169 = vmul.f32 %v814, %v1085
    %v1170 = vmul.f32 %v820, %v1085
    %v1171 = vmul.f32 %v826, %v1085
    %v1172 = vmul.f32 %v832, %v1085
    %v1173 = vmul.f32 %v838, %v1085
    %v1174 = vmul.f32 %v844, %v1085
    %v1175 = vmul.f32 %v850, %v1085
    %v1176 = vmul.f32 %v856, %v1085
    %v1177 = vmul.f32 %v862, %v1085
    %v1178 = vmul.f32 %v868, %v1085
    %v1179 = vmul.f32 %v874, %v1085
    %v1180 = vmul.f32 %v880, %v1085
    %v1181 = vmul.f32 %v886, %v1085
    %v1182 = vmul.f32 %v892, %v1085
    %v1183 = vmul.f32 %v898, %v1085
    %v1184 = vmul.f32 %v904, %v1085
    %v1185 = vmul.f32 %v910, %v1085
    %v1186 = vmul.f32 %v916, %v1085
    %v1187 = vmul.f32 %v922, %v1085
    %v1188 = vmul.f32 %v928, %v1085
    %v1189 = vmul.f32 %v934, %v1085
    %v1190 = vmul.f32 %v940, %v1085
    %v1191 = vmul.f32 %v946, %v1085
    %v1192 = vmul.f32 %v952, %v1085
    %v1193 = vmul.f32 %v958, %v1085
    %v1194 = vmul.f32 %v964, %v1085
    %v1195 = vmul.f32 %v970, %v1085
    %v1196 = vmul.f32 %v976, %v1085
    %v1197 = vmul.f32 %v982, %v1085
    %v1198 = vmul.f32 %v988, %v1085
    %v1199 = vmul.f32 %v994, %v1085
    %v1200 = vmul.f32 %v1000, %v1085
    %v1201 = vmul.f32 %v1006, %v1085
    %v1202 = vmul.f32 %v1012, %v1085
    %v1203 = vmul.f32 %v1018, %v1085
    %v1204 = vmul.f32 %v1024, %v1085
    %v1205 = vmul.f32 %v1030, %v1085
    %v1206 = vmul.f32 %v1036, %v1085
    %v1207 = vmul.f32 %v1042, %v1085
    %v1208 = vmul.f32 %v1048, %v1085
    %v1209 = vmul.f32 %v1054, %v1085
    %v1210 = vmul.f32 %v1060, %v1085
    %v1211 = vmul.f32 %v1066, %v1085
    %v1212 = vmul.f32 %v1072, %v1085
    %v1213 = vmul.f32 %v1078, %v1085
    %v1214 = vld [vmem:[%s0] sm:$0xf]
    %v1215 = vld [vmem:[%s0 + $0x4] sm:$0xf]
    %v1216 = vld [vmem:[%s0 + $0x8] sm:$0xf]
    %v1217 = vld [vmem:[%s0 + $0xc] sm:$0xf]
    %v1218 = vld [vmem:[%s0 + $0x10] sm:$0xf]
    %v1219 = vld [vmem:[%s0 + $0x14] sm:$0xf]
    %v1220 = vld [vmem:[%s0 + $0x18] sm:$0xf]
    %v1221 = vld [vmem:[%s0 + $0x1c] sm:$0xf]
    %v1222 = vld [vmem:[%s0 + $0x20] sm:$0xf]
    %v1223 = vld [vmem:[%s0 + $0x24] sm:$0xf]
    %v1224 = vld [vmem:[%s0 + $0x28] sm:$0xf]
    %v1225 = vld [vmem:[%s0 + $0x2c] sm:$0xf]
    %v1226 = vld [vmem:[%s0 + $0x30] sm:$0xf]
    %v1227 = vld [vmem:[%s0 + $0x34] sm:$0xf]
    %v1228 = vld [vmem:[%s0 + $0x38] sm:$0xf]
    %v1229 = vld [vmem:[%s0 + $0x3c] sm:$0xf]
    %v1230 = vld [vmem:[%s3] sm:$0xf]
    %v1231 = vld [vmem:[%s3 + $0x4] sm:$0xf]
    %v1232 = vld [vmem:[%s3 + $0x8] sm:$0xf]
    %v1233 = vld [vmem:[%s3 + $0xc] sm:$0xf]
    %v1234 = vld [vmem:[%s3 + $0x10] sm:$0xf]
    %v1235 = vld [vmem:[%s3 + $0x14] sm:$0xf]
    %v1236 = vld [vmem:[%s3 + $0x18] sm:$0xf]
    %v1237 = vld [vmem:[%s3 + $0x1c] sm:$0xf]
    %v1238 = vld [vmem:[%s3 + $0x20] sm:$0xf]
    %v1239 = vld [vmem:[%s3 + $0x24] sm:$0xf]
    %v1240 = vld [vmem:[%s3 + $0x28] sm:$0xf]
    %v1241 = vld [vmem:[%s3 + $0x2c] sm:$0xf]
    %v1242 = vpack.c.bf16 %v1086, %v1086
    %v1243 = vpack.c.bf16 %v1087, %v1087
    %v1244 = vpack.c.bf16 %v1088, %v1088
    %v1245 = vpack.c.bf16 %v1089, %v1089
    %v1246 = vpack.c.bf16 %v1090, %v1090
    %v1247 = vpack.c.bf16 %v1091, %v1091
    %v1248 = vpack.c.bf16 %v1092, %v1092
    %v1249 = vpack.c.bf16 %v1093, %v1093
    %v1250 = vpack.c.bf16 %v1094, %v1094
    %v1251 = vpack.c.bf16 %v1095, %v1095
    %v1252 = vpack.c.bf16 %v1096, %v1096
    %v1253 = vpack.c.bf16 %v1097, %v1097
    %v1254 = vpack.c.bf16 %v1098, %v1098
    %v1255 = vpack.c.bf16 %v1099, %v1099
    %v1256 = vpack.c.bf16 %v1100, %v1100
    %v1257 = vpack.c.bf16 %v1101, %v1101
    %v1258 = vpack.c.bf16 %v1102, %v1102
    %v1259 = vpack.c.bf16 %v1103, %v1103
    %v1260 = vpack.c.bf16 %v1104, %v1104
    %v1261 = vpack.c.bf16 %v1105, %v1105
    %v1262 = vpack.c.bf16 %v1106, %v1106
    %v1263 = vpack.c.bf16 %v1107, %v1107
    %v1264 = vpack.c.bf16 %v1108, %v1108
    %v1265 = vpack.c.bf16 %v1109, %v1109
    %v1266 = vpack.c.bf16 %v1110, %v1110
    %v1267 = vpack.c.bf16 %v1111, %v1111
    %v1268 = vpack.c.bf16 %v1112, %v1112
    %v1269 = vpack.c.bf16 %v1113, %v1113
    %v1270 = vpack.c.bf16 %v1114, %v1114
    %v1271 = vpack.c.bf16 %v1115, %v1115
    %v1272 = vpack.c.bf16 %v1116, %v1116
    %v1273 = vpack.c.bf16 %v1117, %v1117
    %v1274 = vpack.c.bf16 %v1118, %v1118
    %v1275 = vpack.c.bf16 %v1119, %v1119
    %v1276 = vpack.c.bf16 %v1120, %v1120
    %v1277 = vpack.c.bf16 %v1121, %v1121
    %v1278 = vpack.c.bf16 %v1122, %v1122
    %v1279 = vpack.c.bf16 %v1123, %v1123
    %v1280 = vpack.c.bf16 %v1124, %v1124
    %v1281 = vpack.c.bf16 %v1125, %v1125
    %v1282 = vpack.c.bf16 %v1126, %v1126
    %v1283 = vpack.c.bf16 %v1127, %v1127
    %v1284 = vpack.c.bf16 %v1128, %v1128
    %v1285 = vpack.c.bf16 %v1129, %v1129
    %v1286 = vpack.c.bf16 %v1130, %v1130
    %v1287 = vpack.c.bf16 %v1131, %v1131
    %v1288 = vpack.c.bf16 %v1132, %v1132
    %v1289 = vpack.c.bf16 %v1133, %v1133
    %v1290 = vpack.c.bf16 %v1134, %v1134
    %v1291 = vpack.c.bf16 %v1135, %v1135
    %v1292 = vpack.c.bf16 %v1136, %v1136
    %v1293 = vpack.c.bf16 %v1137, %v1137
    %v1294 = vpack.c.bf16 %v1138, %v1138
    %v1295 = vpack.c.bf16 %v1139, %v1139
    %v1296 = vpack.c.bf16 %v1140, %v1140
    %v1297 = vpack.c.bf16 %v1141, %v1141
    %v1298 = vpack.c.bf16 %v1142, %v1142
    %v1299 = vpack.c.bf16 %v1143, %v1143
    %v1300 = vpack.c.bf16 %v1144, %v1144
    %v1301 = vpack.c.bf16 %v1145, %v1145
    %v1302 = vpack.c.bf16 %v1146, %v1146
    %v1303 = vpack.c.bf16 %v1147, %v1147
    %v1304 = vpack.c.bf16 %v1148, %v1148
    %v1305 = vpack.c.bf16 %v1149, %v1149
    %v1306 = vpack.c.bf16 %v1150, %v1150
    %v1307 = vpack.c.bf16 %v1151, %v1151
    %v1308 = vpack.c.bf16 %v1152, %v1152
    %v1309 = vpack.c.bf16 %v1153, %v1153
    %v1310 = vpack.c.bf16 %v1154, %v1154
    %v1311 = vpack.c.bf16 %v1155, %v1155
    %v1312 = vpack.c.bf16 %v1156, %v1156
    %v1313 = vpack.c.bf16 %v1157, %v1157
    %v1314 = vpack.c.bf16 %v1158, %v1158
    %v1315 = vpack.c.bf16 %v1159, %v1159
    %v1316 = vpack.c.bf16 %v1160, %v1160
    %v1317 = vpack.c.bf16 %v1161, %v1161
    %v1318 = vpack.c.bf16 %v1162, %v1162
    %v1319 = vpack.c.bf16 %v1163, %v1163
    %v1320 = vpack.c.bf16 %v1164, %v1164
    %v1321 = vpack.c.bf16 %v1165, %v1165
    %v1322 = vpack.c.bf16 %v1166, %v1166
    %v1323 = vpack.c.bf16 %v1167, %v1167
    %v1324 = vpack.c.bf16 %v1168, %v1168
    %v1325 = vpack.c.bf16 %v1169, %v1169
    %v1326 = vpack.c.bf16 %v1170, %v1170
    %v1327 = vpack.c.bf16 %v1171, %v1171
    %v1328 = vpack.c.bf16 %v1172, %v1172
    %v1329 = vpack.c.bf16 %v1173, %v1173
    %v1330 = vpack.c.bf16 %v1174, %v1174
    %v1331 = vpack.c.bf16 %v1175, %v1175
    %v1332 = vpack.c.bf16 %v1176, %v1176
    %v1333 = vpack.c.bf16 %v1177, %v1177
    %v1334 = vpack.c.bf16 %v1178, %v1178
    %v1335 = vpack.c.bf16 %v1179, %v1179
    %v1336 = vpack.c.bf16 %v1180, %v1180
    %v1337 = vpack.c.bf16 %v1181, %v1181
    %v1338 = vpack.c.bf16 %v1182, %v1182
    %v1339 = vpack.c.bf16 %v1183, %v1183
    %v1340 = vpack.c.bf16 %v1184, %v1184
    %v1341 = vpack.c.bf16 %v1185, %v1185
    %v1342 = vpack.c.bf16 %v1186, %v1186
    %v1343 = vpack.c.bf16 %v1187, %v1187
    %v1344 = vpack.c.bf16 %v1188, %v1188
    %v1345 = vpack.c.bf16 %v1189, %v1189
    %v1346 = vpack.c.bf16 %v1190, %v1190
    %v1347 = vpack.c.bf16 %v1191, %v1191
    %v1348 = vpack.c.bf16 %v1192, %v1192
    %v1349 = vpack.c.bf16 %v1193, %v1193
    %v1350 = vpack.c.bf16 %v1194, %v1194
    %v1351 = vpack.c.bf16 %v1195, %v1195
    %v1352 = vpack.c.bf16 %v1196, %v1196
    %v1353 = vpack.c.bf16 %v1197, %v1197
    %v1354 = vpack.c.bf16 %v1198, %v1198
    %v1355 = vpack.c.bf16 %v1199, %v1199
    %v1356 = vpack.c.bf16 %v1200, %v1200
    %v1357 = vpack.c.bf16 %v1201, %v1201
    %v1358 = vpack.c.bf16 %v1202, %v1202
    %v1359 = vpack.c.bf16 %v1203, %v1203
    %v1360 = vpack.c.bf16 %v1204, %v1204
    %v1361 = vpack.c.bf16 %v1205, %v1205
    %v1362 = vpack.c.bf16 %v1206, %v1206
    %v1363 = vpack.c.bf16 %v1207, %v1207
    %v1364 = vpack.c.bf16 %v1208, %v1208
    %v1365 = vpack.c.bf16 %v1209, %v1209
    %v1366 = vpack.c.bf16 %v1210, %v1210
    %v1367 = vpack.c.bf16 %v1211, %v1211
    %v1368 = vpack.c.bf16 %v1212, %v1212
    %v1369 = vpack.c.bf16 %v1213, %v1213
    %v1370 = vld [vmem:[%s4] sm:$0xf]
    %v1371 = vld [vmem:[%s4 + $0x4] sm:$0xf]
    %v1372 = vld [vmem:[%s4 + $0x8] sm:$0xf]
    %v1373 = vld [vmem:[%s4 + $0xc] sm:$0xf]
    %v1374 = vld [vmem:[%s4 + $0x10] sm:$0xf]
    %v1375 = vld [vmem:[%s4 + $0x14] sm:$0xf]
    %v1376 = vld [vmem:[%s4 + $0x18] sm:$0xf]
    %v1377 = vld [vmem:[%s4 + $0x1c] sm:$0xf]
    %v1378 = vld [vmem:[%s4 + $0x20] sm:$0xf]
    %v1379 = vld [vmem:[%s4 + $0x24] sm:$0xf]
    %v1380 = vld [vmem:[%s4 + $0x28] sm:$0xf]
    %v1381 = vld [vmem:[%s4 + $0x2c] sm:$0xf]
    %v1382 = vld [vmem:[%s4 + $0x30] sm:$0xf]
    %v1383 = vld [vmem:[%s4 + $0x34] sm:$0xf]
    %v1384 = vld [vmem:[%s4 + $0x38] sm:$0xf]
    %v1385 = vld [vmem:[%s4 + $0x3c] sm:$0xf]
    %v1514 = vunpack.c.l.b16 %v1242
    %v1515 = vunpack.c.l.b16 %v1243
    %v1516 = vunpack.c.l.b16 %v1244
    %v1517 = vunpack.c.l.b16 %v1245
    %v1518 = vunpack.c.l.b16 %v1246
    %v1519 = vunpack.c.l.b16 %v1247
    %v1520 = vunpack.c.l.b16 %v1248
    %v1521 = vunpack.c.l.b16 %v1249
    %v1522 = vunpack.c.l.b16 %v1250
    %v1523 = vunpack.c.l.b16 %v1251
    %v1524 = vunpack.c.l.b16 %v1252
    %v1525 = vunpack.c.l.b16 %v1253
    %v1526 = vunpack.c.l.b16 %v1254
    %v1527 = vunpack.c.l.b16 %v1255
    %v1528 = vunpack.c.l.b16 %v1256
    %v1529 = vunpack.c.l.b16 %v1257
    %v1530 = vunpack.c.l.b16 %v1258
    %v1531 = vunpack.c.l.b16 %v1259
    %v1532 = vunpack.c.l.b16 %v1260
    %v1533 = vunpack.c.l.b16 %v1261
    %v1534 = vunpack.c.l.b16 %v1262
    %v1535 = vunpack.c.l.b16 %v1263
    %v1536 = vunpack.c.l.b16 %v1264
    %v1537 = vunpack.c.l.b16 %v1265
    %v1538 = vunpack.c.l.b16 %v1266
    %v1539 = vunpack.c.l.b16 %v1267
    %v1540 = vunpack.c.l.b16 %v1268
    %v1541 = vunpack.c.l.b16 %v1269
    %v1542 = vunpack.c.l.b16 %v1270
    %v1543 = vunpack.c.l.b16 %v1271
    %v1544 = vunpack.c.l.b16 %v1272
    %v1545 = vunpack.c.l.b16 %v1273
    %v1546 = vunpack.c.l.b16 %v1274
    %v1547 = vunpack.c.l.b16 %v1275
    %v1548 = vunpack.c.l.b16 %v1276
    %v1549 = vunpack.c.l.b16 %v1277
    %v1550 = vunpack.c.l.b16 %v1278
    %v1551 = vunpack.c.l.b16 %v1279
    %v1552 = vunpack.c.l.b16 %v1280
    %v1553 = vunpack.c.l.b16 %v1281
    %v1554 = vunpack.c.l.b16 %v1282
    %v1555 = vunpack.c.l.b16 %v1283
    %v1556 = vunpack.c.l.b16 %v1284
    %v1557 = vunpack.c.l.b16 %v1285
    %v1558 = vunpack.c.l.b16 %v1286
    %v1559 = vunpack.c.l.b16 %v1287
    %v1560 = vunpack.c.l.b16 %v1288
    %v1561 = vunpack.c.l.b16 %v1289
    %v1562 = vunpack.c.l.b16 %v1290
    %v1563 = vunpack.c.l.b16 %v1291
    %v1564 = vunpack.c.l.b16 %v1292
    %v1565 = vunpack.c.l.b16 %v1293
    %v1566 = vunpack.c.l.b16 %v1294
    %v1567 = vunpack.c.l.b16 %v1295
    %v1568 = vunpack.c.l.b16 %v1296
    %v1569 = vunpack.c.l.b16 %v1297
    %v1570 = vunpack.c.l.b16 %v1298
    %v1571 = vunpack.c.l.b16 %v1299
    %v1572 = vunpack.c.l.b16 %v1300
    %v1573 = vunpack.c.l.b16 %v1301
    %v1574 = vunpack.c.l.b16 %v1302
    %v1575 = vunpack.c.l.b16 %v1303
    %v1576 = vunpack.c.l.b16 %v1304
    %v1577 = vunpack.c.l.b16 %v1305
    %v1578 = vunpack.c.l.b16 %v1306
    %v1579 = vunpack.c.l.b16 %v1307
    %v1580 = vunpack.c.l.b16 %v1308
    %v1581 = vunpack.c.l.b16 %v1309
    %v1582 = vunpack.c.l.b16 %v1310
    %v1583 = vunpack.c.l.b16 %v1311
    %v1584 = vunpack.c.l.b16 %v1312
    %v1585 = vunpack.c.l.b16 %v1313
    %v1586 = vunpack.c.l.b16 %v1314
    %v1587 = vunpack.c.l.b16 %v1315
    %v1588 = vunpack.c.l.b16 %v1316
    %v1589 = vunpack.c.l.b16 %v1317
    %v1590 = vunpack.c.l.b16 %v1318
    %v1591 = vunpack.c.l.b16 %v1319
    %v1592 = vunpack.c.l.b16 %v1320
    %v1593 = vunpack.c.l.b16 %v1321
    %v1594 = vunpack.c.l.b16 %v1322
    %v1595 = vunpack.c.l.b16 %v1323
    %v1596 = vunpack.c.l.b16 %v1324
    %v1597 = vunpack.c.l.b16 %v1325
    %v1598 = vunpack.c.l.b16 %v1326
    %v1599 = vunpack.c.l.b16 %v1327
    %v1600 = vunpack.c.l.b16 %v1328
    %v1601 = vunpack.c.l.b16 %v1329
    %v1602 = vunpack.c.l.b16 %v1330
    %v1603 = vunpack.c.l.b16 %v1331
    %v1604 = vunpack.c.l.b16 %v1332
    %v1605 = vunpack.c.l.b16 %v1333
    %v1606 = vunpack.c.l.b16 %v1334
    %v1607 = vunpack.c.l.b16 %v1335
    %v1608 = vunpack.c.l.b16 %v1336
    %v1609 = vunpack.c.l.b16 %v1337
    %v1610 = vunpack.c.l.b16 %v1338
    %v1611 = vunpack.c.l.b16 %v1339
    %v1612 = vunpack.c.l.b16 %v1340
    %v1613 = vunpack.c.l.b16 %v1341
    %v1614 = vunpack.c.l.b16 %v1342
    %v1615 = vunpack.c.l.b16 %v1343
    %v1616 = vunpack.c.l.b16 %v1344
    %v1617 = vunpack.c.l.b16 %v1345
    %v1618 = vunpack.c.l.b16 %v1346
    %v1619 = vunpack.c.l.b16 %v1347
    %v1620 = vunpack.c.l.b16 %v1348
    %v1621 = vunpack.c.l.b16 %v1349
    %v1622 = vunpack.c.l.b16 %v1350
    %v1623 = vunpack.c.l.b16 %v1351
    %v1624 = vunpack.c.l.b16 %v1352
    %v1625 = vunpack.c.l.b16 %v1353
    %v1626 = vunpack.c.l.b16 %v1354
    %v1627 = vunpack.c.l.b16 %v1355
    %v1628 = vunpack.c.l.b16 %v1356
    %v1629 = vunpack.c.l.b16 %v1357
    %v1630 = vunpack.c.l.b16 %v1358
    %v1631 = vunpack.c.l.b16 %v1359
    %v1632 = vunpack.c.l.b16 %v1360
    %v1633 = vunpack.c.l.b16 %v1361
    %v1634 = vunpack.c.l.b16 %v1362
    %v1635 = vunpack.c.l.b16 %v1363
    %v1636 = vunpack.c.l.b16 %v1364
    %v1637 = vunpack.c.l.b16 %v1365
    %v1638 = vunpack.c.l.b16 %v1366
    %v1639 = vunpack.c.l.b16 %v1367
    %v1640 = vunpack.c.l.b16 %v1368
    %v1641 = vunpack.c.l.b16 %v1369
    %vm1642 = vcmask 1041409
    %v1643 = vsel %vm1642, %v1515, %v1514
    %vm1644 = vcmask 1042434
    %v1645 = vsel %vm1644, %v1516, %v1643
    %vm1646 = vcmask 1043459
    %v1647 = vsel %vm1646, %v1517, %v1645
    %vm1648 = vcmask 1044484
    %v1649 = vsel %vm1648, %v1518, %v1647
    %vm1650 = vcmask 1045509
    %v1651 = vsel %vm1650, %v1519, %v1649
    %vm1652 = vcmask 1046534
    %v1653 = vsel %vm1652, %v1520, %v1651
    %vm1654 = vcmask 1047559
    %v1655 = vsel %vm1654, %v1521, %v1653
    %v1656 = vsel %vm1642, %v1523, %v1522
    %v1657 = vsel %vm1644, %v1524, %v1656
    %v1658 = vsel %vm1646, %v1525, %v1657
    %v1659 = vsel %vm1648, %v1526, %v1658
    %v1660 = vsel %vm1650, %v1527, %v1659
    %v1661 = vsel %vm1652, %v1528, %v1660
    %v1662 = vsel %vm1654, %v1529, %v1661
    %v1663 = vsel %vm1642, %v1531, %v1530
    %v1664 = vsel %vm1644, %v1532, %v1663
    %v1665 = vsel %vm1646, %v1533, %v1664
    %v1666 = vsel %vm1648, %v1534, %v1665
    %v1667 = vsel %vm1650, %v1535, %v1666
    %v1668 = vsel %vm1652, %v1536, %v1667
    %v1669 = vsel %vm1654, %v1537, %v1668
    %v1670 = vsel %vm1642, %v1539, %v1538
    %v1671 = vsel %vm1644, %v1540, %v1670
    %v1672 = vsel %vm1646, %v1541, %v1671
    %v1673 = vsel %vm1648, %v1542, %v1672
    %v1674 = vsel %vm1650, %v1543, %v1673
    %v1675 = vsel %vm1652, %v1544, %v1674
    %v1676 = vsel %vm1654, %v1545, %v1675
    %v1677 = vsel %vm1642, %v1547, %v1546
    %v1678 = vsel %vm1644, %v1548, %v1677
    %v1679 = vsel %vm1646, %v1549, %v1678
    %v1680 = vsel %vm1648, %v1550, %v1679
    %v1681 = vsel %vm1650, %v1551, %v1680
    %v1682 = vsel %vm1652, %v1552, %v1681
    %v1683 = vsel %vm1654, %v1553, %v1682
    %v1684 = vsel %vm1642, %v1555, %v1554
    %v1685 = vsel %vm1644, %v1556, %v1684
    %v1686 = vsel %vm1646, %v1557, %v1685
    %v1687 = vsel %vm1648, %v1558, %v1686
    %v1688 = vsel %vm1650, %v1559, %v1687
    %v1689 = vsel %vm1652, %v1560, %v1688
    %v1690 = vsel %vm1654, %v1561, %v1689
    %v1691 = vsel %vm1642, %v1563, %v1562
    %v1692 = vsel %vm1644, %v1564, %v1691
    %v1693 = vsel %vm1646, %v1565, %v1692
    %v1694 = vsel %vm1648, %v1566, %v1693
    %v1695 = vsel %vm1650, %v1567, %v1694
    %v1696 = vsel %vm1652, %v1568, %v1695
    %v1697 = vsel %vm1654, %v1569, %v1696
    %v1698 = vsel %vm1642, %v1571, %v1570
    %v1699 = vsel %vm1644, %v1572, %v1698
    %v1700 = vsel %vm1646, %v1573, %v1699
    %v1701 = vsel %vm1648, %v1574, %v1700
    %v1702 = vsel %vm1650, %v1575, %v1701
    %v1703 = vsel %vm1652, %v1576, %v1702
    %v1704 = vsel %vm1654, %v1577, %v1703
    %v1705 = vsel %vm1642, %v1579, %v1578
    %v1706 = vsel %vm1644, %v1580, %v1705
    %v1707 = vsel %vm1646, %v1581, %v1706
    %v1708 = vsel %vm1648, %v1582, %v1707
    %v1709 = vsel %vm1650, %v1583, %v1708
    %v1710 = vsel %vm1652, %v1584, %v1709
    %v1711 = vsel %vm1654, %v1585, %v1710
    %v1712 = vsel %vm1642, %v1587, %v1586
    %v1713 = vsel %vm1644, %v1588, %v1712
    %v1714 = vsel %vm1646, %v1589, %v1713
    %v1715 = vsel %vm1648, %v1590, %v1714
    %v1716 = vsel %vm1650, %v1591, %v1715
    %v1717 = vsel %vm1652, %v1592, %v1716
    %v1718 = vsel %vm1654, %v1593, %v1717
    %v1719 = vsel %vm1642, %v1595, %v1594
    %v1720 = vsel %vm1644, %v1596, %v1719
    %v1721 = vsel %vm1646, %v1597, %v1720
    %v1722 = vsel %vm1648, %v1598, %v1721
    %v1723 = vsel %vm1650, %v1599, %v1722
    %v1724 = vsel %vm1652, %v1600, %v1723
    %v1725 = vsel %vm1654, %v1601, %v1724
    %v1726 = vsel %vm1642, %v1603, %v1602
    %v1727 = vsel %vm1644, %v1604, %v1726
    %v1728 = vsel %vm1646, %v1605, %v1727
    %v1729 = vsel %vm1648, %v1606, %v1728
    %v1730 = vsel %vm1650, %v1607, %v1729
    %v1731 = vsel %vm1652, %v1608, %v1730
    %v1732 = vsel %vm1654, %v1609, %v1731
    %v1733 = vsel %vm1642, %v1611, %v1610
    %v1734 = vsel %vm1644, %v1612, %v1733
    %v1735 = vsel %vm1646, %v1613, %v1734
    %v1736 = vsel %vm1648, %v1614, %v1735
    %v1737 = vsel %vm1650, %v1615, %v1736
    %v1738 = vsel %vm1652, %v1616, %v1737
    %v1739 = vsel %vm1654, %v1617, %v1738
    %v1740 = vsel %vm1642, %v1619, %v1618
    %v1741 = vsel %vm1644, %v1620, %v1740
    %v1742 = vsel %vm1646, %v1621, %v1741
    %v1743 = vsel %vm1648, %v1622, %v1742
    %v1744 = vsel %vm1650, %v1623, %v1743
    %v1745 = vsel %vm1652, %v1624, %v1744
    %v1746 = vsel %vm1654, %v1625, %v1745
    %v1747 = vsel %vm1642, %v1627, %v1626
    %v1748 = vsel %vm1644, %v1628, %v1747
    %v1749 = vsel %vm1646, %v1629, %v1748
    %v1750 = vsel %vm1648, %v1630, %v1749
    %v1751 = vsel %vm1650, %v1631, %v1750
    %v1752 = vsel %vm1652, %v1632, %v1751
    %v1753 = vsel %vm1654, %v1633, %v1752
    %v1754 = vsel %vm1642, %v1635, %v1634
    %v1755 = vsel %vm1644, %v1636, %v1754
    %v1756 = vsel %vm1646, %v1637, %v1755
    %v1757 = vsel %vm1648, %v1638, %v1756
    %v1758 = vsel %vm1650, %v1639, %v1757
    %v1759 = vsel %vm1652, %v1640, %v1758
    %v1760 = vsel %vm1654, %v1641, %v1759
    %v1761 = vpack.c.b16 %v1662, %v1655
    %v1762 = vpack.c.b16 %v1676, %v1669
    %v1763 = vpack.c.b16 %v1690, %v1683
    %v1764 = vpack.c.b16 %v1704, %v1697
    %v1765 = vpack.c.b16 %v1718, %v1711
    %v1766 = vpack.c.b16 %v1732, %v1725
    %v1767 = vpack.c.b16 %v1746, %v1739
    %v1768 = vpack.c.b16 %v1760, %v1753
    %v1793 = vunpack.c.l.b16 %v1370
    %v1794 = vunpack.c.l.b16 %v1371
    %v1795 = vunpack.c.l.b16 %v1372
    %v1796 = vunpack.c.l.b16 %v1373
    %v1797 = vunpack.c.l.b16 %v1374
    %v1798 = vunpack.c.l.b16 %v1375
    %v1799 = vunpack.c.l.b16 %v1376
    %v1800 = vunpack.c.l.b16 %v1377
    %v1801 = vunpack.c.l.b16 %v1378
    %v1802 = vunpack.c.l.b16 %v1379
    %v1803 = vunpack.c.l.b16 %v1380
    %v1804 = vunpack.c.l.b16 %v1381
    %v1805 = vunpack.c.l.b16 %v1382
    %v1806 = vunpack.c.l.b16 %v1383
    %v1807 = vunpack.c.l.b16 %v1384
    %v1808 = vunpack.c.l.b16 %v1385
    %v1809 = vpack.c.b16 %v1794, %v1793
    %v1810 = vpack.c.b16 %v1796, %v1795
    %v1811 = vpack.c.b16 %v1798, %v1797
    %v1812 = vpack.c.b16 %v1800, %v1799
    %v1813 = vpack.c.b16 %v1802, %v1801
    %v1814 = vpack.c.b16 %v1804, %v1803
    %v1815 = vpack.c.b16 %v1806, %v1805
    %v1816 = vpack.c.b16 %v1808, %v1807
    %1825 = vmatpush.bf16.msra.mxu0 %v1816
    %1826 = vmatpush.bf16.msra.mxu0 %v1815
    %1827 = vmatpush.bf16.msra.mxu0 %v1814
    %1828 = vmatpush.bf16.msra.mxu0 %v1813
    %1829 = vmatpush.bf16.msra.mxu0 %v1812
    %1830 = vmatpush.bf16.msra.mxu0 %v1811
    %1831 = vmatpush.bf16.msra.mxu0 %v1810
    %1832 = vmatpush.bf16.msra.mxu0 %v1809
    %1833 = vmatmul.bf16.gmra.mxu0 %v1761
    %v1834 = vpop.f32.mrf.mxu0
    %v1835 = vadd.f32 0.0, %v1834
    %v1836 = vpop.f32.mrf.mxu0
    %v1837 = vadd.f32 0.0, %v1836
    %1838 = vmatmul.bf16.gmra.mxu0 %v1762
    %v1839 = vpop.f32.mrf.mxu0
    %v1840 = vadd.f32 0.0, %v1839
    %v1841 = vpop.f32.mrf.mxu0
    %v1842 = vadd.f32 0.0, %v1841
    %1843 = vmatmul.bf16.gmra.mxu0 %v1763
    %v1844 = vpop.f32.mrf.mxu0
    %v1845 = vadd.f32 0.0, %v1844
    %v1846 = vpop.f32.mrf.mxu0
    %v1847 = vadd.f32 0.0, %v1846
    %1848 = vmatmul.bf16.gmra.mxu0 %v1764
    %v1849 = vpop.f32.mrf.mxu0
    %v1850 = vadd.f32 0.0, %v1849
    %v1851 = vpop.f32.mrf.mxu0
    %v1852 = vadd.f32 0.0, %v1851
    %1853 = vmatmul.bf16.gmra.mxu0 %v1765
    %v1854 = vpop.f32.mrf.mxu0
    %v1855 = vadd.f32 0.0, %v1854
    %v1856 = vpop.f32.mrf.mxu0
    %v1857 = vadd.f32 0.0, %v1856
    %1858 = vmatmul.bf16.gmra.mxu0 %v1766
    %v1859 = vpop.f32.mrf.mxu0
    %v1860 = vadd.f32 0.0, %v1859
    %v1861 = vpop.f32.mrf.mxu0
    %v1862 = vadd.f32 0.0, %v1861
    %1863 = vmatmul.bf16.gmra.mxu0 %v1767
    %v1864 = vpop.f32.mrf.mxu0
    %v1865 = vadd.f32 0.0, %v1864
    %v1866 = vpop.f32.mrf.mxu0
    %v1867 = vadd.f32 0.0, %v1866
    %1868 = vmatmul.bf16.gmra.mxu0 %v1768
    %v1869 = vpop.f32.mrf.mxu0
    %v1870 = vadd.f32 0.0, %v1869
    %v1871 = vpop.f32.mrf.mxu0
    %v1872 = vadd.f32 0.0, %v1871
    %1873 = vdwg.mxu0
    %v1890 = vunpack.c.l.b16 %v1214
    %v1891 = vunpack.c.l.b16 %v1215
    %v1892 = vunpack.c.l.b16 %v1216
    %v1893 = vunpack.c.l.b16 %v1217
    %v1894 = vunpack.c.l.b16 %v1218
    %v1895 = vunpack.c.l.b16 %v1219
    %v1896 = vunpack.c.l.b16 %v1220
    %v1897 = vunpack.c.l.b16 %v1221
    %v1898 = vunpack.c.l.b16 %v1222
    %v1899 = vunpack.c.l.b16 %v1223
    %v1900 = vunpack.c.l.b16 %v1224
    %v1901 = vunpack.c.l.b16 %v1225
    %v1902 = vunpack.c.l.b16 %v1226
    %v1903 = vunpack.c.l.b16 %v1227
    %v1904 = vunpack.c.l.b16 %v1228
    %v1905 = vunpack.c.l.b16 %v1229
    %v1906 = vpack.c.b16 %v1891, %v1890
    %v1907 = vpack.c.b16 %v1893, %v1892
    %v1908 = vpack.c.b16 %v1895, %v1894
    %v1909 = vpack.c.b16 %v1897, %v1896
    %v1910 = vpack.c.b16 %v1899, %v1898
    %v1911 = vpack.c.b16 %v1901, %v1900
    %v1912 = vpack.c.b16 %v1903, %v1902
    %v1913 = vpack.c.b16 %v1905, %v1904
    %v1926 = vunpack.c.l.b16 %v1230
    %v1927 = vunpack.c.l.b16 %v1231
    %v1928 = vunpack.c.l.b16 %v1232
    %v1929 = vunpack.c.l.b16 %v1233
    %v1930 = vunpack.c.l.b16 %v1234
    %v1931 = vunpack.c.l.b16 %v1235
    %v1932 = vunpack.c.l.b16 %v1236
    %v1933 = vunpack.c.l.b16 %v1237
    %v1934 = vunpack.c.l.b16 %v1238
    %v1935 = vunpack.c.l.b16 %v1239
    %v1936 = vunpack.c.l.b16 %v1240
    %v1937 = vunpack.c.l.b16 %v1241
    %v1938 = vpack.c.b16 %v1927, %v1926
    %v1939 = vpack.c.b16 %v1929, %v1928
    %v1940 = vpack.c.b16 %v1931, %v1930
    %v1941 = vpack.c.b16 %v1933, %v1932
    %v1942 = vpack.c.b16 %v1935, %v1934
    %v1943 = vpack.c.b16 %v1937, %v1936
    %vm1950 = vcmask 785408
    %v1952 = vsel %vm1950, %v1906, 0
    %v1955 = vsel %vm1950, %v1907, 0
    %v1958 = vsel %vm1950, %v1908, 0
    %v1961 = vsel %vm1950, %v1909, 0
    %v1964 = vsel %vm1950, %v1910, 0
    %v1967 = vsel %vm1950, %v1911, 0
    %v1970 = vsel %vm1950, %v1912, 0
    %v1973 = vsel %vm1950, %v1913, 0
    %1975 = vmatpush.bf16.msra.mxu0 0
    %1976 = vmatpush.bf16.msra.mxu0 0
    %1977 = vmatpush.bf16.msra.mxu0 %v1943
    %1978 = vmatpush.bf16.msra.mxu0 %v1942
    %1979 = vmatpush.bf16.msra.mxu0 %v1941
    %1980 = vmatpush.bf16.msra.mxu0 %v1940
    %1981 = vmatpush.bf16.msra.mxu0 %v1939
    %1982 = vmatpush.bf16.msra.mxu0 %v1938
    %1983 = vmatmul.bf16.gmra.mxu0 %v1952
    %v1984 = vpop.f32.mrf.mxu0
    %v1985 = vadd.f32 %v1835, %v1984
    %v1986 = vpop.f32.mrf.mxu0
    %v1987 = vadd.f32 %v1837, %v1986
    %1988 = vmatmul.bf16.gmra.mxu0 %v1955
    %v1989 = vpop.f32.mrf.mxu0
    %v1990 = vadd.f32 %v1840, %v1989
    %v1991 = vpop.f32.mrf.mxu0
    %v1992 = vadd.f32 %v1842, %v1991
    %1993 = vmatmul.bf16.gmra.mxu0 %v1958
    %v1994 = vpop.f32.mrf.mxu0
    %v1995 = vadd.f32 %v1845, %v1994
    %v1996 = vpop.f32.mrf.mxu0
    %v1997 = vadd.f32 %v1847, %v1996
    %1998 = vmatmul.bf16.gmra.mxu0 %v1961
    %v1999 = vpop.f32.mrf.mxu0
    %v2000 = vadd.f32 %v1850, %v1999
    %v2001 = vpop.f32.mrf.mxu0
    %v2002 = vadd.f32 %v1852, %v2001
    %2003 = vmatmul.bf16.gmra.mxu0 %v1964
    %v2004 = vpop.f32.mrf.mxu0
    %v2005 = vadd.f32 %v1855, %v2004
    %v2006 = vpop.f32.mrf.mxu0
    %v2007 = vadd.f32 %v1857, %v2006
    %2008 = vmatmul.bf16.gmra.mxu0 %v1967
    %v2009 = vpop.f32.mrf.mxu0
    %v2010 = vadd.f32 %v1860, %v2009
    %v2011 = vpop.f32.mrf.mxu0
    %v2012 = vadd.f32 %v1862, %v2011
    %2013 = vmatmul.bf16.gmra.mxu0 %v1970
    %v2014 = vpop.f32.mrf.mxu0
    %v2015 = vadd.f32 %v1865, %v2014
    %v2016 = vpop.f32.mrf.mxu0
    %v2017 = vadd.f32 %v1867, %v2016
    %2018 = vmatmul.bf16.gmra.mxu0 %v1973
    %v2019 = vpop.f32.mrf.mxu0
    %v2020 = vadd.f32 %v1870, %v2019
    %v2021 = vpop.f32.mrf.mxu0
    %v2022 = vadd.f32 %v1872, %v2021
    %2023 = vdwg.mxu0
    %v2024 = vld [vmem:[%s5] sm:$0x1]
    %v2026 = vperm.slane %v2024, 0
    %v2028 = vadd.f32 %v1985, %v2026
    %v2029 = vadd.f32 %v1987, %v2026
    %v2030 = vadd.f32 %v1990, %v2026
    %v2031 = vadd.f32 %v1992, %v2026
    %v2032 = vadd.f32 %v1995, %v2026
    %v2033 = vadd.f32 %v1997, %v2026
    %v2034 = vadd.f32 %v2000, %v2026
    %v2035 = vadd.f32 %v2002, %v2026
    %v2036 = vadd.f32 %v2005, %v2026
    %v2037 = vadd.f32 %v2007, %v2026
    %v2038 = vadd.f32 %v2010, %v2026
    %v2039 = vadd.f32 %v2012, %v2026
    %v2040 = vadd.f32 %v2015, %v2026
    %v2041 = vadd.f32 %v2017, %v2026
    %v2042 = vadd.f32 %v2020, %v2026
    %v2043 = vadd.f32 %v2022, %v2026
    %v2044 = vmax.f32 %v2028, 0.0
    %v2045 = vmax.f32 %v2029, 0.0
    %v2046 = vmax.f32 %v2030, 0.0
    %v2047 = vmax.f32 %v2031, 0.0
    %v2048 = vmax.f32 %v2032, 0.0
    %v2049 = vmax.f32 %v2033, 0.0
    %v2050 = vmax.f32 %v2034, 0.0
    %v2051 = vmax.f32 %v2035, 0.0
    %v2052 = vmax.f32 %v2036, 0.0
    %v2053 = vmax.f32 %v2037, 0.0
    %v2054 = vmax.f32 %v2038, 0.0
    %v2055 = vmax.f32 %v2039, 0.0
    %v2056 = vmax.f32 %v2040, 0.0
    %v2057 = vmax.f32 %v2041, 0.0
    %v2058 = vmax.f32 %v2042, 0.0
    %v2059 = vmax.f32 %v2043, 0.0
    %v2060 = vpack.c.bf16 %v2045, %v2044
    %v2061 = vpack.c.bf16 %v2047, %v2046
    %v2062 = vpack.c.bf16 %v2049, %v2048
    %v2063 = vpack.c.bf16 %v2051, %v2050
    %v2064 = vpack.c.bf16 %v2053, %v2052
    %v2065 = vpack.c.bf16 %v2055, %v2054
    %v2066 = vpack.c.bf16 %v2057, %v2056
    %v2067 = vpack.c.bf16 %v2059, %v2058
    %v2068 = vld [vmem:[%s6] sm:$0xf]
    %v2069 = vld [vmem:[%s6 + $0x4] sm:$0xf]
    %v2070 = vld [vmem:[%s6 + $0x8] sm:$0xf]
    %v2071 = vld [vmem:[%s6 + $0xc] sm:$0xf]
    %v2072 = vld [vmem:[%s6 + $0x10] sm:$0xf]
    %v2073 = vld [vmem:[%s6 + $0x14] sm:$0xf]
    %v2074 = vld [vmem:[%s6 + $0x18] sm:$0xf]
    %v2075 = vld [vmem:[%s6 + $0x1c] sm:$0xf]
    %v2076 = vld [vmem:[%s7] sm:$0x1]
    %v2078 = vperm.slane %v2076, 0
    %v2088 = vunpack.c.l.b16 %v2068
    %v2089 = vunpack.c.l.b16 %v2069
    %v2090 = vunpack.c.l.b16 %v2070
    %v2091 = vunpack.c.l.b16 %v2071
    %v2092 = vunpack.c.l.b16 %v2072
    %v2093 = vunpack.c.l.b16 %v2073
    %v2094 = vunpack.c.l.b16 %v2074
    %v2095 = vunpack.c.l.b16 %v2075
    %v2096 = vpack.c.b16 %v2089, %v2088
    %v2097 = vpack.c.b16 %v2091, %v2090
    %v2098 = vpack.c.b16 %v2093, %v2092
    %v2099 = vpack.c.b16 %v2095, %v2094
    %vm2104 = vcmask 523264
    %v2106 = vsel %vm2104, %v2060, 0
    %v2109 = vsel %vm2104, %v2061, 0
    %v2112 = vsel %vm2104, %v2062, 0
    %v2115 = vsel %vm2104, %v2063, 0
    %v2118 = vsel %vm2104, %v2064, 0
    %v2121 = vsel %vm2104, %v2065, 0
    %v2124 = vsel %vm2104, %v2066, 0
    %v2127 = vsel %vm2104, %v2067, 0
    %2129 = vmatpush.bf16.msra.mxu0 0
    %2130 = vmatpush.bf16.msra.mxu0 0
    %2131 = vmatpush.bf16.msra.mxu0 0
    %2132 = vmatpush.bf16.msra.mxu0 0
    %2133 = vmatpush.bf16.msra.mxu0 %v2099
    %2134 = vmatpush.bf16.msra.mxu0 %v2098
    %2135 = vmatpush.bf16.msra.mxu0 %v2097
    %2136 = vmatpush.bf16.msra.mxu0 %v2096
    %2137 = vmatmul.bf16.gmra.mxu0 %v2106
    %v2138 = vpop.f32.mrf.mxu0
    %v2139 = vadd.f32 %v2078, %v2138
    %v2140 = vpop.f32.mrf.mxu0
    %v2141 = vadd.f32 %v2078, %v2140
    %2142 = vmatmul.bf16.gmra.mxu0 %v2109
    %v2143 = vpop.f32.mrf.mxu0
    %v2144 = vadd.f32 %v2078, %v2143
    %v2145 = vpop.f32.mrf.mxu0
    %v2146 = vadd.f32 %v2078, %v2145
    %2147 = vmatmul.bf16.gmra.mxu0 %v2112
    %v2148 = vpop.f32.mrf.mxu0
    %v2149 = vadd.f32 %v2078, %v2148
    %v2150 = vpop.f32.mrf.mxu0
    %v2151 = vadd.f32 %v2078, %v2150
    %2152 = vmatmul.bf16.gmra.mxu0 %v2115
    %v2153 = vpop.f32.mrf.mxu0
    %v2154 = vadd.f32 %v2078, %v2153
    %v2155 = vpop.f32.mrf.mxu0
    %v2156 = vadd.f32 %v2078, %v2155
    %2157 = vmatmul.bf16.gmra.mxu0 %v2118
    %v2158 = vpop.f32.mrf.mxu0
    %v2159 = vadd.f32 %v2078, %v2158
    %v2160 = vpop.f32.mrf.mxu0
    %v2161 = vadd.f32 %v2078, %v2160
    %2162 = vmatmul.bf16.gmra.mxu0 %v2121
    %v2163 = vpop.f32.mrf.mxu0
    %v2164 = vadd.f32 %v2078, %v2163
    %v2165 = vpop.f32.mrf.mxu0
    %v2166 = vadd.f32 %v2078, %v2165
    %2167 = vmatmul.bf16.gmra.mxu0 %v2124
    %v2168 = vpop.f32.mrf.mxu0
    %v2169 = vadd.f32 %v2078, %v2168
    %v2170 = vpop.f32.mrf.mxu0
    %v2171 = vadd.f32 %v2078, %v2170
    %2172 = vmatmul.bf16.gmra.mxu0 %v2127
    %v2173 = vpop.f32.mrf.mxu0
    %v2174 = vadd.f32 %v2078, %v2173
    %v2175 = vpop.f32.mrf.mxu0
    %v2176 = vadd.f32 %v2078, %v2175
    %2177 = vdwg.mxu0
    %v2178 = vmax.f32 %v2139, 0.0
    %v2179 = vmax.f32 %v2141, 0.0
    %v2180 = vmax.f32 %v2144, 0.0
    %v2181 = vmax.f32 %v2146, 0.0
    %v2182 = vmax.f32 %v2149, 0.0
    %v2183 = vmax.f32 %v2151, 0.0
    %v2184 = vmax.f32 %v2154, 0.0
    %v2185 = vmax.f32 %v2156, 0.0
    %v2186 = vmax.f32 %v2159, 0.0
    %v2187 = vmax.f32 %v2161, 0.0
    %v2188 = vmax.f32 %v2164, 0.0
    %v2189 = vmax.f32 %v2166, 0.0
    %v2190 = vmax.f32 %v2169, 0.0
    %v2191 = vmax.f32 %v2171, 0.0
    %v2192 = vmax.f32 %v2174, 0.0
    %v2193 = vmax.f32 %v2176, 0.0
    %v2194 = vld [vmem:[%s8] sm:$0x1]
    %v2196 = vperm.slane %v2194, 0
    %v2198 = vmul.f32 %v2178, %v2196
    %v2199 = vmul.f32 %v2179, %v2196
    %v2200 = vmul.f32 %v2180, %v2196
    %v2201 = vmul.f32 %v2181, %v2196
    %v2202 = vmul.f32 %v2182, %v2196
    %v2203 = vmul.f32 %v2183, %v2196
    %v2204 = vmul.f32 %v2184, %v2196
    %v2205 = vmul.f32 %v2185, %v2196
    %v2206 = vmul.f32 %v2186, %v2196
    %v2207 = vmul.f32 %v2187, %v2196
    %v2208 = vmul.f32 %v2188, %v2196
    %v2209 = vmul.f32 %v2189, %v2196
    %v2210 = vmul.f32 %v2190, %v2196
    %v2211 = vmul.f32 %v2191, %v2196
    %v2212 = vmul.f32 %v2192, %v2196
    %v2213 = vmul.f32 %v2193, %v2196
    %vm2214 = vcmask 261120
    %v2215 = vsel %vm2214, %v2198, 0.0
    %2216 = vadd.xlane.f32.xlu0 %v2215
    %v2217 = vpop.xlane.xlu0 %2216
    %v2218 = vsel %vm2214, %v2199, 0.0
    %2219 = vadd.xlane.f32.xlu0 %v2218
    %v2220 = vpop.xlane.xlu0 %2219
    %v2221 = vsel %vm2214, %v2200, 0.0
    %2222 = vadd.xlane.f32.xlu0 %v2221
    %v2223 = vpop.xlane.xlu0 %2222
    %v2224 = vsel %vm2214, %v2201, 0.0
    %2225 = vadd.xlane.f32.xlu0 %v2224
    %v2226 = vpop.xlane.xlu0 %2225
    %v2227 = vsel %vm2214, %v2202, 0.0
    %2228 = vadd.xlane.f32.xlu0 %v2227
    %v2229 = vpop.xlane.xlu0 %2228
    %v2230 = vsel %vm2214, %v2203, 0.0
    %2231 = vadd.xlane.f32.xlu0 %v2230
    %v2232 = vpop.xlane.xlu0 %2231
    %v2233 = vsel %vm2214, %v2204, 0.0
    %2234 = vadd.xlane.f32.xlu0 %v2233
    %v2235 = vpop.xlane.xlu0 %2234
    %v2236 = vsel %vm2214, %v2205, 0.0
    %2237 = vadd.xlane.f32.xlu0 %v2236
    %v2238 = vpop.xlane.xlu0 %2237
    %v2239 = vsel %vm2214, %v2206, 0.0
    %2240 = vadd.xlane.f32.xlu0 %v2239
    %v2241 = vpop.xlane.xlu0 %2240
    %v2242 = vsel %vm2214, %v2207, 0.0
    %2243 = vadd.xlane.f32.xlu0 %v2242
    %v2244 = vpop.xlane.xlu0 %2243
    %v2245 = vsel %vm2214, %v2208, 0.0
    %2246 = vadd.xlane.f32.xlu0 %v2245
    %v2247 = vpop.xlane.xlu0 %2246
    %v2248 = vsel %vm2214, %v2209, 0.0
    %2249 = vadd.xlane.f32.xlu0 %v2248
    %v2250 = vpop.xlane.xlu0 %2249
    %v2251 = vsel %vm2214, %v2210, 0.0
    %2252 = vadd.xlane.f32.xlu0 %v2251
    %v2253 = vpop.xlane.xlu0 %2252
    %v2254 = vsel %vm2214, %v2211, 0.0
    %2255 = vadd.xlane.f32.xlu0 %v2254
    %v2256 = vpop.xlane.xlu0 %2255
    %v2257 = vsel %vm2214, %v2212, 0.0
    %2258 = vadd.xlane.f32.xlu0 %v2257
    %v2259 = vpop.xlane.xlu0 %2258
    %v2260 = vsel %vm2214, %v2213, 0.0
    %2261 = vadd.xlane.f32.xlu0 %v2260
    %v2262 = vpop.xlane.xlu0 %2261
    %v2263 = vld [vmem:[%s2] sm:$0xff]
    %v2264 = vld [vmem:[%s2 + $0x8] sm:$0xff]
    %v2265 = vld [vmem:[%s2 + $0x10] sm:$0xff]
    %v2266 = vld [vmem:[%s2 + $0x18] sm:$0xff]
    %v2267 = vld [vmem:[%s2 + $0x20] sm:$0xff]
    %v2268 = vld [vmem:[%s2 + $0x28] sm:$0xff]
    %v2269 = vld [vmem:[%s2 + $0x30] sm:$0xff]
    %v2270 = vld [vmem:[%s2 + $0x38] sm:$0xff]
    %v2271 = vld [vmem:[%s2 + $0x40] sm:$0xff]
    %v2272 = vld [vmem:[%s2 + $0x48] sm:$0xff]
    %v2273 = vld [vmem:[%s2 + $0x50] sm:$0xff]
    %v2274 = vld [vmem:[%s2 + $0x58] sm:$0xff]
    %v2275 = vld [vmem:[%s2 + $0x60] sm:$0xff]
    %v2276 = vld [vmem:[%s2 + $0x68] sm:$0xff]
    %v2277 = vld [vmem:[%s2 + $0x70] sm:$0xff]
    %v2278 = vld [vmem:[%s2 + $0x78] sm:$0xff]
    %vm2279 = vcmask 23552
    %v2280 = vsel %vm2279, %v2263, 0.0
    %2281 = vadd.xlane.f32.xlu0 %v2280
    %v2282 = vpop.xlane.xlu0 %2281
    %v2283 = vsel %vm2279, %v2264, 0.0
    %2284 = vadd.xlane.f32.xlu0 %v2283
    %v2285 = vpop.xlane.xlu0 %2284
    %v2286 = vsel %vm2279, %v2265, 0.0
    %2287 = vadd.xlane.f32.xlu0 %v2286
    %v2288 = vpop.xlane.xlu0 %2287
    %v2289 = vsel %vm2279, %v2266, 0.0
    %2290 = vadd.xlane.f32.xlu0 %v2289
    %v2291 = vpop.xlane.xlu0 %2290
    %v2292 = vsel %vm2279, %v2267, 0.0
    %2293 = vadd.xlane.f32.xlu0 %v2292
    %v2294 = vpop.xlane.xlu0 %2293
    %v2295 = vsel %vm2279, %v2268, 0.0
    %2296 = vadd.xlane.f32.xlu0 %v2295
    %v2297 = vpop.xlane.xlu0 %2296
    %v2298 = vsel %vm2279, %v2269, 0.0
    %2299 = vadd.xlane.f32.xlu0 %v2298
    %v2300 = vpop.xlane.xlu0 %2299
    %v2301 = vsel %vm2279, %v2270, 0.0
    %2302 = vadd.xlane.f32.xlu0 %v2301
    %v2303 = vpop.xlane.xlu0 %2302
    %v2304 = vsel %vm2279, %v2271, 0.0
    %2305 = vadd.xlane.f32.xlu0 %v2304
    %v2306 = vpop.xlane.xlu0 %2305
    %v2307 = vsel %vm2279, %v2272, 0.0
    %2308 = vadd.xlane.f32.xlu0 %v2307
    %v2309 = vpop.xlane.xlu0 %2308
    %v2310 = vsel %vm2279, %v2273, 0.0
    %2311 = vadd.xlane.f32.xlu0 %v2310
    %v2312 = vpop.xlane.xlu0 %2311
    %v2313 = vsel %vm2279, %v2274, 0.0
    %2314 = vadd.xlane.f32.xlu0 %v2313
    %v2315 = vpop.xlane.xlu0 %2314
    %v2316 = vsel %vm2279, %v2275, 0.0
    %2317 = vadd.xlane.f32.xlu0 %v2316
    %v2318 = vpop.xlane.xlu0 %2317
    %v2319 = vsel %vm2279, %v2276, 0.0
    %2320 = vadd.xlane.f32.xlu0 %v2319
    %v2321 = vpop.xlane.xlu0 %2320
    %v2322 = vsel %vm2279, %v2277, 0.0
    %2323 = vadd.xlane.f32.xlu0 %v2322
    %v2324 = vpop.xlane.xlu0 %2323
    %v2325 = vsel %vm2279, %v2278, 0.0
    %2326 = vadd.xlane.f32.xlu0 %v2325
    %v2327 = vpop.xlane.xlu0 %2326
    %v2328 = vadd.f32 %v2217, %v2282
    %v2329 = vadd.f32 %v2220, %v2285
    %v2330 = vadd.f32 %v2223, %v2288
    %v2331 = vadd.f32 %v2226, %v2291
    %v2332 = vadd.f32 %v2229, %v2294
    %v2333 = vadd.f32 %v2232, %v2297
    %v2334 = vadd.f32 %v2235, %v2300
    %v2335 = vadd.f32 %v2238, %v2303
    %v2336 = vadd.f32 %v2241, %v2306
    %v2337 = vadd.f32 %v2244, %v2309
    %v2338 = vadd.f32 %v2247, %v2312
    %v2339 = vadd.f32 %v2250, %v2315
    %v2340 = vadd.f32 %v2253, %v2318
    %v2341 = vadd.f32 %v2256, %v2321
    %v2342 = vadd.f32 %v2259, %v2324
    %v2343 = vadd.f32 %v2262, %v2327
    %v2344 = vld [vmem:[#allocation2] sm:$0x1]
    %2346 = vset.pattern.permute.xlu0 0
    %2347 = vperm.xlu0 %2346, %v2344
    %v2348 = vpop.permute.xlu0 %2347
    %v2350 = vperm.slane %v2348, 0
    %v2351 = vadd.f32 %v2328, %v2350
    %v2352 = vadd.f32 %v2329, %v2350
    %v2353 = vadd.f32 %v2330, %v2350
    %v2354 = vadd.f32 %v2331, %v2350
    %v2355 = vadd.f32 %v2332, %v2350
    %v2356 = vadd.f32 %v2333, %v2350
    %v2357 = vadd.f32 %v2334, %v2350
    %v2358 = vadd.f32 %v2335, %v2350
    %v2359 = vadd.f32 %v2336, %v2350
    %v2360 = vadd.f32 %v2337, %v2350
    %v2361 = vadd.f32 %v2338, %v2350
    %v2362 = vadd.f32 %v2339, %v2350
    %v2363 = vadd.f32 %v2340, %v2350
    %v2364 = vadd.f32 %v2341, %v2350
    %v2365 = vadd.f32 %v2342, %v2350
    %v2366 = vadd.f32 %v2343, %v2350
    %v2367 = vxor.u32 %v2351, 2147483648
    %v2368 = vxor.u32 %v2352, 2147483648
    %v2369 = vxor.u32 %v2353, 2147483648
    %v2370 = vxor.u32 %v2354, 2147483648
    %v2371 = vxor.u32 %v2355, 2147483648
    %v2372 = vxor.u32 %v2356, 2147483648
    %v2373 = vxor.u32 %v2357, 2147483648
    %v2374 = vxor.u32 %v2358, 2147483648
    %v2375 = vxor.u32 %v2359, 2147483648
    %v2376 = vxor.u32 %v2360, 2147483648
    %v2377 = vxor.u32 %v2361, 2147483648
    %v2378 = vxor.u32 %v2362, 2147483648
    %v2379 = vxor.u32 %v2363, 2147483648
    %v2380 = vxor.u32 %v2364, 2147483648
    %v2381 = vxor.u32 %v2365, 2147483648
    %v2382 = vxor.u32 %v2366, 2147483648
    %v2383 = vmul.f32 %v2367, 1.442695
    %v2384 = vpow.pop %v2383
    %v2385 = vmul.f32 %v2368, 1.442695
    %v2386 = vpow.pop %v2385
    %v2387 = vmul.f32 %v2369, 1.442695
    %v2388 = vpow.pop %v2387
    %v2389 = vmul.f32 %v2370, 1.442695
    %v2390 = vpow.pop %v2389
    %v2391 = vmul.f32 %v2371, 1.442695
    %v2392 = vpow.pop %v2391
    %v2393 = vmul.f32 %v2372, 1.442695
    %v2394 = vpow.pop %v2393
    %v2395 = vmul.f32 %v2373, 1.442695
    %v2396 = vpow.pop %v2395
    %v2397 = vmul.f32 %v2374, 1.442695
    %v2398 = vpow.pop %v2397
    %v2399 = vmul.f32 %v2375, 1.442695
    %v2400 = vpow.pop %v2399
    %v2401 = vmul.f32 %v2376, 1.442695
    %v2402 = vpow.pop %v2401
    %v2403 = vmul.f32 %v2377, 1.442695
    %v2404 = vpow.pop %v2403
    %v2405 = vmul.f32 %v2378, 1.442695
    %v2406 = vpow.pop %v2405
    %v2407 = vmul.f32 %v2379, 1.442695
    %v2408 = vpow.pop %v2407
    %v2409 = vmul.f32 %v2380, 1.442695
    %v2410 = vpow.pop %v2409
    %v2411 = vmul.f32 %v2381, 1.442695
    %v2412 = vpow.pop %v2411
    %v2413 = vmul.f32 %v2382, 1.442695
    %v2414 = vpow.pop %v2413
    %v2415 = vadd.f32 %v2384, 1.0
    %v2416 = vadd.f32 %v2386, 1.0
    %v2417 = vadd.f32 %v2388, 1.0
    %v2418 = vadd.f32 %v2390, 1.0
    %v2419 = vadd.f32 %v2392, 1.0
    %v2420 = vadd.f32 %v2394, 1.0
    %v2421 = vadd.f32 %v2396, 1.0
    %v2422 = vadd.f32 %v2398, 1.0
    %v2423 = vadd.f32 %v2400, 1.0
    %v2424 = vadd.f32 %v2402, 1.0
    %v2425 = vadd.f32 %v2404, 1.0
    %v2426 = vadd.f32 %v2406, 1.0
    %v2427 = vadd.f32 %v2408, 1.0
    %v2428 = vadd.f32 %v2410, 1.0
    %v2429 = vadd.f32 %v2412, 1.0
    %v2430 = vadd.f32 %v2414, 1.0
    %v2431 = vrcp.pop %v2415
    %v2432 = vmul.f32 %v2415, %v2431
    %v2433 = vsub.f32 1.0, %v2432
    %v2434 = vmul.f32 %v2431, %v2433
    %v2435 = vadd.f32 %v2431, %v2434
    %vm2436 = vweird.f32 %v2415
    %vm2437 = vweird.f32 %v2431
    %vm2438 = vmor %vm2436, %vm2437
    %v2439 = vsel %vm2438, %v2431, %v2435
    %v2440 = vand.u32 2147483647, %v2415
    %vm2441 = vcmp.eq.f32.partialorder %v2440, 8.507059e+37
    %v2442 = vand.u32 %v2415, 2147483648
    %v2443 = vor.u32 1.1754944e-38, %v2442
    %v2444 = vsel %vm2441, %v2443, %v2439
    %v2445 = vmul.f32 1.0, %v2444
    %v2446 = vrcp.pop %v2416
    %v2447 = vmul.f32 %v2416, %v2446
    %v2448 = vsub.f32 1.0, %v2447
    %v2449 = vmul.f32 %v2446, %v2448
    %v2450 = vadd.f32 %v2446, %v2449
    %vm2451 = vweird.f32 %v2416
    %vm2452 = vweird.f32 %v2446
    %vm2453 = vmor %vm2451, %vm2452
    %v2454 = vsel %vm2453, %v2446, %v2450
    %v2455 = vand.u32 2147483647, %v2416
    %vm2456 = vcmp.eq.f32.partialorder %v2455, 8.507059e+37
    %v2457 = vand.u32 %v2416, 2147483648
    %v2458 = vor.u32 1.1754944e-38, %v2457
    %v2459 = vsel %vm2456, %v2458, %v2454
    %v2460 = vmul.f32 1.0, %v2459
    %v2461 = vrcp.pop %v2417
    %v2462 = vmul.f32 %v2417, %v2461
    %v2463 = vsub.f32 1.0, %v2462
    %v2464 = vmul.f32 %v2461, %v2463
    %v2465 = vadd.f32 %v2461, %v2464
    %vm2466 = vweird.f32 %v2417
    %vm2467 = vweird.f32 %v2461
    %vm2468 = vmor %vm2466, %vm2467
    %v2469 = vsel %vm2468, %v2461, %v2465
    %v2470 = vand.u32 2147483647, %v2417
    %vm2471 = vcmp.eq.f32.partialorder %v2470, 8.507059e+37
    %v2472 = vand.u32 %v2417, 2147483648
    %v2473 = vor.u32 1.1754944e-38, %v2472
    %v2474 = vsel %vm2471, %v2473, %v2469
    %v2475 = vmul.f32 1.0, %v2474
    %v2476 = vrcp.pop %v2418
    %v2477 = vmul.f32 %v2418, %v2476
    %v2478 = vsub.f32 1.0, %v2477
    %v2479 = vmul.f32 %v2476, %v2478
    %v2480 = vadd.f32 %v2476, %v2479
    %vm2481 = vweird.f32 %v2418
    %vm2482 = vweird.f32 %v2476
    %vm2483 = vmor %vm2481, %vm2482
    %v2484 = vsel %vm2483, %v2476, %v2480
    %v2485 = vand.u32 2147483647, %v2418
    %vm2486 = vcmp.eq.f32.partialorder %v2485, 8.507059e+37
    %v2487 = vand.u32 %v2418, 2147483648
    %v2488 = vor.u32 1.1754944e-38, %v2487
    %v2489 = vsel %vm2486, %v2488, %v2484
    %v2490 = vmul.f32 1.0, %v2489
    %v2491 = vrcp.pop %v2419
    %v2492 = vmul.f32 %v2419, %v2491
    %v2493 = vsub.f32 1.0, %v2492
    %v2494 = vmul.f32 %v2491, %v2493
    %v2495 = vadd.f32 %v2491, %v2494
    %vm2496 = vweird.f32 %v2419
    %vm2497 = vweird.f32 %v2491
    %vm2498 = vmor %vm2496, %vm2497
    %v2499 = vsel %vm2498, %v2491, %v2495
    %v2500 = vand.u32 2147483647, %v2419
    %vm2501 = vcmp.eq.f32.partialorder %v2500, 8.507059e+37
    %v2502 = vand.u32 %v2419, 2147483648
    %v2503 = vor.u32 1.1754944e-38, %v2502
    %v2504 = vsel %vm2501, %v2503, %v2499
    %v2505 = vmul.f32 1.0, %v2504
    %v2506 = vrcp.pop %v2420
    %v2507 = vmul.f32 %v2420, %v2506
    %v2508 = vsub.f32 1.0, %v2507
    %v2509 = vmul.f32 %v2506, %v2508
    %v2510 = vadd.f32 %v2506, %v2509
    %vm2511 = vweird.f32 %v2420
    %vm2512 = vweird.f32 %v2506
    %vm2513 = vmor %vm2511, %vm2512
    %v2514 = vsel %vm2513, %v2506, %v2510
    %v2515 = vand.u32 2147483647, %v2420
    %vm2516 = vcmp.eq.f32.partialorder %v2515, 8.507059e+37
    %v2517 = vand.u32 %v2420, 2147483648
    %v2518 = vor.u32 1.1754944e-38, %v2517
    %v2519 = vsel %vm2516, %v2518, %v2514
    %v2520 = vmul.f32 1.0, %v2519
    %v2521 = vrcp.pop %v2421
    %v2522 = vmul.f32 %v2421, %v2521
    %v2523 = vsub.f32 1.0, %v2522
    %v2524 = vmul.f32 %v2521, %v2523
    %v2525 = vadd.f32 %v2521, %v2524
    %vm2526 = vweird.f32 %v2421
    %vm2527 = vweird.f32 %v2521
    %vm2528 = vmor %vm2526, %vm2527
    %v2529 = vsel %vm2528, %v2521, %v2525
    %v2530 = vand.u32 2147483647, %v2421
    %vm2531 = vcmp.eq.f32.partialorder %v2530, 8.507059e+37
    %v2532 = vand.u32 %v2421, 2147483648
    %v2533 = vor.u32 1.1754944e-38, %v2532
    %v2534 = vsel %vm2531, %v2533, %v2529
    %v2535 = vmul.f32 1.0, %v2534
    %v2536 = vrcp.pop %v2422
    %v2537 = vmul.f32 %v2422, %v2536
    %v2538 = vsub.f32 1.0, %v2537
    %v2539 = vmul.f32 %v2536, %v2538
    %v2540 = vadd.f32 %v2536, %v2539
    %vm2541 = vweird.f32 %v2422
    %vm2542 = vweird.f32 %v2536
    %vm2543 = vmor %vm2541, %vm2542
    %v2544 = vsel %vm2543, %v2536, %v2540
    %v2545 = vand.u32 2147483647, %v2422
    %vm2546 = vcmp.eq.f32.partialorder %v2545, 8.507059e+37
    %v2547 = vand.u32 %v2422, 2147483648
    %v2548 = vor.u32 1.1754944e-38, %v2547
    %v2549 = vsel %vm2546, %v2548, %v2544
    %v2550 = vmul.f32 1.0, %v2549
    %v2551 = vrcp.pop %v2423
    %v2552 = vmul.f32 %v2423, %v2551
    %v2553 = vsub.f32 1.0, %v2552
    %v2554 = vmul.f32 %v2551, %v2553
    %v2555 = vadd.f32 %v2551, %v2554
    %vm2556 = vweird.f32 %v2423
    %vm2557 = vweird.f32 %v2551
    %vm2558 = vmor %vm2556, %vm2557
    %v2559 = vsel %vm2558, %v2551, %v2555
    %v2560 = vand.u32 2147483647, %v2423
    %vm2561 = vcmp.eq.f32.partialorder %v2560, 8.507059e+37
    %v2562 = vand.u32 %v2423, 2147483648
    %v2563 = vor.u32 1.1754944e-38, %v2562
    %v2564 = vsel %vm2561, %v2563, %v2559
    %v2565 = vmul.f32 1.0, %v2564
    %v2566 = vrcp.pop %v2424
    %v2567 = vmul.f32 %v2424, %v2566
    %v2568 = vsub.f32 1.0, %v2567
    %v2569 = vmul.f32 %v2566, %v2568
    %v2570 = vadd.f32 %v2566, %v2569
    %vm2571 = vweird.f32 %v2424
    %vm2572 = vweird.f32 %v2566
    %vm2573 = vmor %vm2571, %vm2572
    %v2574 = vsel %vm2573, %v2566, %v2570
    %v2575 = vand.u32 2147483647, %v2424
    %vm2576 = vcmp.eq.f32.partialorder %v2575, 8.507059e+37
    %v2577 = vand.u32 %v2424, 2147483648
    %v2578 = vor.u32 1.1754944e-38, %v2577
    %v2579 = vsel %vm2576, %v2578, %v2574
    %v2580 = vmul.f32 1.0, %v2579
    %v2581 = vrcp.pop %v2425
    %v2582 = vmul.f32 %v2425, %v2581
    %v2583 = vsub.f32 1.0, %v2582
    %v2584 = vmul.f32 %v2581, %v2583
    %v2585 = vadd.f32 %v2581, %v2584
    %vm2586 = vweird.f32 %v2425
    %vm2587 = vweird.f32 %v2581
    %vm2588 = vmor %vm2586, %vm2587
    %v2589 = vsel %vm2588, %v2581, %v2585
    %v2590 = vand.u32 2147483647, %v2425
    %vm2591 = vcmp.eq.f32.partialorder %v2590, 8.507059e+37
    %v2592 = vand.u32 %v2425, 2147483648
    %v2593 = vor.u32 1.1754944e-38, %v2592
    %v2594 = vsel %vm2591, %v2593, %v2589
    %v2595 = vmul.f32 1.0, %v2594
    %v2596 = vrcp.pop %v2426
    %v2597 = vmul.f32 %v2426, %v2596
    %v2598 = vsub.f32 1.0, %v2597
    %v2599 = vmul.f32 %v2596, %v2598
    %v2600 = vadd.f32 %v2596, %v2599
    %vm2601 = vweird.f32 %v2426
    %vm2602 = vweird.f32 %v2596
    %vm2603 = vmor %vm2601, %vm2602
    %v2604 = vsel %vm2603, %v2596, %v2600
    %v2605 = vand.u32 2147483647, %v2426
    %vm2606 = vcmp.eq.f32.partialorder %v2605, 8.507059e+37
    %v2607 = vand.u32 %v2426, 2147483648
    %v2608 = vor.u32 1.1754944e-38, %v2607
    %v2609 = vsel %vm2606, %v2608, %v2604
    %v2610 = vmul.f32 1.0, %v2609
    %v2611 = vrcp.pop %v2427
    %v2612 = vmul.f32 %v2427, %v2611
    %v2613 = vsub.f32 1.0, %v2612
    %v2614 = vmul.f32 %v2611, %v2613
    %v2615 = vadd.f32 %v2611, %v2614
    %vm2616 = vweird.f32 %v2427
    %vm2617 = vweird.f32 %v2611
    %vm2618 = vmor %vm2616, %vm2617
    %v2619 = vsel %vm2618, %v2611, %v2615
    %v2620 = vand.u32 2147483647, %v2427
    %vm2621 = vcmp.eq.f32.partialorder %v2620, 8.507059e+37
    %v2622 = vand.u32 %v2427, 2147483648
    %v2623 = vor.u32 1.1754944e-38, %v2622
    %v2624 = vsel %vm2621, %v2623, %v2619
    %v2625 = vmul.f32 1.0, %v2624
    %v2626 = vrcp.pop %v2428
    %v2627 = vmul.f32 %v2428, %v2626
    %v2628 = vsub.f32 1.0, %v2627
    %v2629 = vmul.f32 %v2626, %v2628
    %v2630 = vadd.f32 %v2626, %v2629
    %vm2631 = vweird.f32 %v2428
    %vm2632 = vweird.f32 %v2626
    %vm2633 = vmor %vm2631, %vm2632
    %v2634 = vsel %vm2633, %v2626, %v2630
    %v2635 = vand.u32 2147483647, %v2428
    %vm2636 = vcmp.eq.f32.partialorder %v2635, 8.507059e+37
    %v2637 = vand.u32 %v2428, 2147483648
    %v2638 = vor.u32 1.1754944e-38, %v2637
    %v2639 = vsel %vm2636, %v2638, %v2634
    %v2640 = vmul.f32 1.0, %v2639
    %v2641 = vrcp.pop %v2429
    %v2642 = vmul.f32 %v2429, %v2641
    %v2643 = vsub.f32 1.0, %v2642
    %v2644 = vmul.f32 %v2641, %v2643
    %v2645 = vadd.f32 %v2641, %v2644
    %vm2646 = vweird.f32 %v2429
    %vm2647 = vweird.f32 %v2641
    %vm2648 = vmor %vm2646, %vm2647
    %v2649 = vsel %vm2648, %v2641, %v2645
    %v2650 = vand.u32 2147483647, %v2429
    %vm2651 = vcmp.eq.f32.partialorder %v2650, 8.507059e+37
    %v2652 = vand.u32 %v2429, 2147483648
    %v2653 = vor.u32 1.1754944e-38, %v2652
    %v2654 = vsel %vm2651, %v2653, %v2649
    %v2655 = vmul.f32 1.0, %v2654
    %v2656 = vrcp.pop %v2430
    %v2657 = vmul.f32 %v2430, %v2656
    %v2658 = vsub.f32 1.0, %v2657
    %v2659 = vmul.f32 %v2656, %v2658
    %v2660 = vadd.f32 %v2656, %v2659
    %vm2661 = vweird.f32 %v2430
    %vm2662 = vweird.f32 %v2656
    %vm2663 = vmor %vm2661, %vm2662
    %v2664 = vsel %vm2663, %v2656, %v2660
    %v2665 = vand.u32 2147483647, %v2430
    %vm2666 = vcmp.eq.f32.partialorder %v2665, 8.507059e+37
    %v2667 = vand.u32 %v2430, 2147483648
    %v2668 = vor.u32 1.1754944e-38, %v2667
    %v2669 = vsel %vm2666, %v2668, %v2664
    %v2670 = vmul.f32 1.0, %v2669
    %v2671 = vmax.f32 %v2445, 1e-07
    %v2672 = vmax.f32 %v2460, 1e-07
    %v2673 = vmax.f32 %v2475, 1e-07
    %v2674 = vmax.f32 %v2490, 1e-07
    %v2675 = vmax.f32 %v2505, 1e-07
    %v2676 = vmax.f32 %v2520, 1e-07
    %v2677 = vmax.f32 %v2535, 1e-07
    %v2678 = vmax.f32 %v2550, 1e-07
    %v2679 = vmax.f32 %v2565, 1e-07
    %v2680 = vmax.f32 %v2580, 1e-07
    %v2681 = vmax.f32 %v2595, 1e-07
    %v2682 = vmax.f32 %v2610, 1e-07
    %v2683 = vmax.f32 %v2625, 1e-07
    %v2684 = vmax.f32 %v2640, 1e-07
    %v2685 = vmax.f32 %v2655, 1e-07
    %v2686 = vmax.f32 %v2670, 1e-07
    %v2687 = vmin.f32 %v2671, 0.9999999
    %v2688 = vmin.f32 %v2672, 0.9999999
    %v2689 = vmin.f32 %v2673, 0.9999999
    %v2690 = vmin.f32 %v2674, 0.9999999
    %v2691 = vmin.f32 %v2675, 0.9999999
    %v2692 = vmin.f32 %v2676, 0.9999999
    %v2693 = vmin.f32 %v2677, 0.9999999
    %v2694 = vmin.f32 %v2678, 0.9999999
    %v2695 = vmin.f32 %v2679, 0.9999999
    %v2696 = vmin.f32 %v2680, 0.9999999
    %v2697 = vmin.f32 %v2681, 0.9999999
    %v2698 = vmin.f32 %v2682, 0.9999999
    %v2699 = vmin.f32 %v2683, 0.9999999
    %v2700 = vmin.f32 %v2684, 0.9999999
    %v2701 = vmin.f32 %v2685, 0.9999999
    %v2702 = vmin.f32 %v2686, 0.9999999
    %v2719 = vlaneseq
    %v2720 = vand.u32 %v2719, 127
    %v2721 = vperm.slane %v2687, %v2720
    %v2722 = vadd.s32 %v2720, 4294967288
    %v2723 = vperm.slane %v2688, %v2722
    %vm2724 = vcmask 130112
    %v2725 = vsel %vm2724, %v2723, %v2721
    %v2726 = vadd.s32 %v2720, 4294967280
    %v2727 = vperm.slane %v2689, %v2726
    %vm2728 = vcmask 195712
    %v2729 = vsel %vm2728, %v2727, %v2725
    %v2730 = vadd.s32 %v2720, 4294967272
    %v2731 = vperm.slane %v2690, %v2730
    %vm2732 = vcmask 261312
    %v2733 = vsel %vm2732, %v2731, %v2729
    %v2734 = vadd.s32 %v2720, 4294967264
    %v2735 = vperm.slane %v2691, %v2734
    %vm2736 = vcmask 326912
    %v2737 = vsel %vm2736, %v2735, %v2733
    %v2738 = vadd.s32 %v2720, 4294967256
    %v2739 = vperm.slane %v2692, %v2738
    %vm2740 = vcmask 392512
    %v2741 = vsel %vm2740, %v2739, %v2737
    %v2742 = vadd.s32 %v2720, 4294967248
    %v2743 = vperm.slane %v2693, %v2742
    %vm2744 = vcmask 458112
    %v2745 = vsel %vm2744, %v2743, %v2741
    %v2746 = vadd.s32 %v2720, 4294967240
    %v2747 = vperm.slane %v2694, %v2746
    %vm2748 = vcmask 523712
    %v2749 = vsel %vm2748, %v2747, %v2745
    %v2750 = vadd.s32 %v2720, 4294967232
    %v2751 = vperm.slane %v2695, %v2750
    %vm2752 = vcmask 589312
    %v2753 = vsel %vm2752, %v2751, %v2749
    %v2754 = vadd.s32 %v2720, 4294967224
    %v2755 = vperm.slane %v2696, %v2754
    %vm2756 = vcmask 654912
    %v2757 = vsel %vm2756, %v2755, %v2753
    %v2758 = vadd.s32 %v2720, 4294967216
    %v2759 = vperm.slane %v2697, %v2758
    %vm2760 = vcmask 720512
    %v2761 = vsel %vm2760, %v2759, %v2757
    %v2762 = vadd.s32 %v2720, 4294967208
    %v2763 = vperm.slane %v2698, %v2762
    %vm2764 = vcmask 786112
    %v2765 = vsel %vm2764, %v2763, %v2761
    %v2766 = vadd.s32 %v2720, 4294967200
    %v2767 = vperm.slane %v2699, %v2766
    %vm2768 = vcmask 851712
    %v2769 = vsel %vm2768, %v2767, %v2765
    %v2770 = vadd.s32 %v2720, 4294967192
    %v2771 = vperm.slane %v2700, %v2770
    %vm2772 = vcmask 917312
    %v2773 = vsel %vm2772, %v2771, %v2769
    %v2774 = vadd.s32 %v2720, 4294967184
    %v2775 = vperm.slane %v2701, %v2774
    %vm2776 = vcmask 982912
    %v2777 = vsel %vm2776, %v2775, %v2773
    %v2778 = vadd.s32 %v2720, 4294967176
    %v2779 = vperm.slane %v2702, %v2778
    %vm2780 = vcmask 1048512
    %v2781 = vsel %vm2780, %v2779, %v2777
    %2783 = vst [vmem:[#allocation6] sm:$0x1] %v2781
    // Predicated region
    $region46: #{tpu_custom_call.1} parent=1 // pred_check
      _
    $region47: #{tpu_custom_call.1} parent=1 // pred_check_branch
      %2785 = sbr.rel (0) target = $region49
    $region48: #{tpu_custom_call.1} parent=1 // pred_region
      %2787 = vsyncadd [#allocation5], 0
      %s2789 = sshll.u32 [#allocation6], 4
      %s2790 = int_to_ptr.vmem [resolvable:$true] %s2789
      %s2791 = sshll.u32 %s10, 4
      %s2792 = int_to_ptr.hbm [resolvable:$true] %s2791
      %2794 = dma.vmem_to_hbm [thread:$0]  %s2790, 16, %s2792, [#allocation5]
    $region49: #{tpu_custom_call.1} parent=1 // pred_fallthru
      _
    // Predicated region
    $region50: #{tpu_custom_call.1} parent=1 // pred_check
      _
    $region51: #{tpu_custom_call.1} parent=1 // pred_check_branch
      %2796 = sbr.rel (0) target = $region53
    $region52: #{tpu_custom_call.1} parent=1 // pred_region
      %2798 = dma.done [#allocation5], 16
    $region53: #{tpu_custom_call.1} parent=1 // pred_fallthru
      _
    %2799 = vsyncpa [#allocation4], 1
    %2800 = vsyncpa [#allocation5], 1

</llo_original>
